<compile_context>
chip_gen: v5e
topology: v5e:2x2
jax: 0.10.0
libtpu: 0.0.40
codegen_flags: <defaults>
</compile_context>

<pallas_src>
import functools

import jax
import jax.numpy as jnp
import numpy as np
from jax import lax
from jax.experimental import pallas as pl
from jax.experimental.pallas import tpu as pltpu

_NEG_BIG = -1e30  # finite "-inf" so masked-row arithmetic never produces NaN


def _round_up(x, m):
    return ((x + m - 1) // m) * m


def _supcon_kernel(row_feat_ref, colT_ref, lab_row_ref, lab_col_ref,
                   coeff_ref, beta_ref, out_ref, m_ref, l_ref, ps_ref, *,
                   inv_temperature, block_m, block_k, n_valid, n_pad,
                   normalized):
    i = pl.program_id(0)            # anchor-row block   ("parallel")
    k = pl.program_id(1)            # contrast-col block ("arbitrary", last)
    nk = pl.num_programs(1)

    @pl.when(k == 0)
    def _init():
        if not normalized:
            m_ref[...] = jnp.full_like(m_ref, _NEG_BIG)
        l_ref[...] = jnp.zeros_like(l_ref)
        ps_ref[...] = jnp.zeros_like(ps_ref)

    # [TM, D] @ [D, TK] on the MXU, f32 accumulation.  Col features were
    # pre-transposed in the wrapper so this is a plain A@B (no per-tile vxpose).
    sim = lax.dot_general(row_feat_ref[...], colT_ref[...],
                          (((1,), (0,)), ((), ())),
                          preferred_element_type=jnp.float32)
    sim = sim * inv_temperature                                     # [TM, TK]

    # Column labels come from the resident [1, N] copy (no per-step label DMA).
    col_start = pl.multiple_of(k * block_k, 128)
    lab_col = lab_col_ref[:, pl.ds(col_start, block_k)]              # [1, TK]
    pos = lab_row_ref[...] == lab_col                                # [TM, TK]

    has_pad = n_valid < n_pad       # static Python bool

    def update(valid):
        """Accumulate this tile; valid=None means every column is valid."""
        pos_eff = pos if valid is None else jnp.logical_and(pos, valid)
        if normalized:
            # L2-normalized features => sim <= 1/T is a static max bound, so the
            # online max / rescale machinery is unnecessary.
            p = jnp.exp(sim - inv_temperature)
            if valid is not None:
                p = jnp.where(valid, p, 0.0)
            l_ref[...] += jnp.sum(p, axis=1, keepdims=True)
        else:
            masked_sim = sim if valid is None else jnp.where(valid, sim, _NEG_BIG)
            tile_max = jnp.max(masked_sim, axis=1, keepdims=True)
            m_prev = m_ref[...]
            m_new = jnp.maximum(m_prev, tile_max)
            alpha = jnp.exp(m_prev - m_new)
            p = jnp.exp(sim - m_new)
            if valid is not None:
                p = jnp.where(valid, p, 0.0)
            l_ref[...] = alpha * l_ref[...] + jnp.sum(p, axis=1, keepdims=True)
            m_ref[...] = m_new
        # sum(pos * sim) is linear in sim -> never needs softmax rescaling.
        ps_ref[...] += jnp.sum(jnp.where(pos_eff, sim, 0.0), axis=1, keepdims=True)

    # Edge tiles touch the self-diagonal and/or padded columns and need masks;
    # interior tiles (the vast majority for large grids) skip them entirely.
    if has_pad:
        is_edge = jnp.logical_or(i == k, k == nk - 1)
    else:
        is_edge = i == k

    @pl.when(is_edge)
    def _edge():
        row_idx = i * block_m + lax.broadcasted_iota(jnp.int32, (block_m, 1), 0)
        col_idx = col_start + lax.broadcasted_iota(jnp.int32, (1, block_k), 1)
        valid = row_idx != col_idx                       # exclude self-contrast
        if has_pad:
            valid = jnp.logical_and(valid, col_idx < n_valid)   # exclude padding
        update(valid)

    @pl.when(jnp.logical_not(is_edge))
    def _interior():
        update(None)

    @pl.when(k == nk - 1)
    def _finalize():
        if normalized:
            log_denom = inv_temperature + jnp.log(l_ref[...])
        else:
            log_denom = m_ref[...] + jnp.log(l_ref[...])
        # loss_row = coeff * sum(pos*sim) - beta * logsumexp, where
        #   coeff = -(T/base_T) * class_gate / n_pos,  beta = coeff * n_pos
        # (precomputed on the host; zero for padded rows and rows w/o positives).
        out_ref[...] = coeff_ref[...] * ps_ref[...] - beta_ref[...] * log_denom


def supcon_loss_pallas(features, labels, target_labels, temperature=0.07,
                       base_temperature=None, block=256,
                       matmul_dtype=jnp.bfloat16, normalized=False):
    """features: [bsz, n_views, ...]; labels: [bsz] int; target_labels: list of ints.

    normalized=True is a fast path valid only for (approximately) L2-normalized
    features (the usual SupCon setting); it replaces the online max with the
    static bound 1/temperature.
    """
    if base_temperature is None:
        base_temperature = temperature   # module __init__ sets base_temperature = temperature
    bsz, n_views = features.shape[0], features.shape[1]
    feat = features.reshape(bsz, n_views, -1)
    dim = feat.shape[-1]
    n = n_views * bsz

    # contrast_feature = cat(unbind(features, dim=1), 0): row index v*bsz + b
    contrast = jnp.transpose(feat, (1, 0, 2)).reshape(n, dim).astype(jnp.float32)

    mm_dtype = jnp.dtype(matmul_dtype) if matmul_dtype is not None else jnp.dtype(jnp.float32)
    itemsize = mm_dtype.itemsize

    # Lane-aligned tiling: block is always a multiple of 128 so every BlockSpec
    # and the in-kernel dynamic label slice are vreg-aligned.  Shrink the block
    # if double-buffered feature tiles would blow a v7x-safe VMEM budget.
    block = max(128, _round_up(int(block), 128))
    block = min(block, _round_up(n, 128))
    d_pad = _round_up(max(dim, 1), 128)
    while block > 128 and 4 * block * d_pad * itemsize > (32 << 20):
        block -= 128
    n_pad = _round_up(n, block)
    nblk = n_pad // block

    contrast_p = jnp.zeros((n_pad, d_pad), jnp.float32).at[:n, :dim].set(contrast)
    contrast_p = contrast_p.astype(mm_dtype)            # bf16 by default
    contrast_t = contrast_p.T                            # [d_pad, n_pad], once in HBM

    labels_i32 = labels.astype(jnp.int32).reshape(-1)
    labels_rep = jnp.tile(labels_i32, n_views)                     # [N]
    pad_label = jnp.iinfo(jnp.int32).min
    labels_p = jnp.full((n_pad,), pad_label, jnp.int32).at[:n].set(labels_rep)
    lab_row = labels_p.reshape(n_pad, 1)
    lab_col = labels_p.reshape(1, n_pad)                 # resident in VMEM

    # Host-side per-anchor constants: positive count, class gate, and the two
    # finalize coefficients (removes the in-kernel positive-count reduction).
    counts = jnp.sum((labels_i32[:, None] == labels_i32[None, :]).astype(jnp.float32), axis=1)
    pc_b = n_views * counts - 1.0                        # positives per anchor
    cmask_b = jnp.zeros((bsz,), jnp.float32)
    for tc in target_labels:
        cmask_b = cmask_b + (labels_i32 == jnp.int32(tc)).astype(jnp.float32)
    loss_scale = -(float(temperature) / float(base_temperature))
    inv_pc = jnp.where(pc_b > 0.0, 1.0 / jnp.maximum(pc_b, 1.0), 0.0)  # guard: no positives -> 0
    coeff_b = loss_scale * cmask_b * inv_pc
    beta_b = coeff_b * pc_b
    coeff_p = jnp.zeros((n_pad, 1), jnp.float32).at[:n, 0].set(jnp.tile(coeff_b, n_views))
    beta_p = jnp.zeros((n_pad, 1), jnp.float32).at[:n, 0].set(jnp.tile(beta_b, n_views))

    # Double-buffered (row + colT) feature tiles + headroom for sim/p
    # temporaries and scratch; capped at 48 MiB so the same config is safe on
    # v7x's 64 MiB VMEM as well as v5e/v6e's 128 MiB.
    feat_tile_bytes = 2 * block * d_pad * itemsize
    vmem_limit = int(min(48 << 20, 2 * feat_tile_bytes + (16 << 20)))

    kernel = functools.partial(
        _supcon_kernel,
        inv_temperature=float(1.0 / temperature),
        block_m=block, block_k=block, n_valid=n, n_pad=n_pad,
        normalized=bool(normalized),
    )

    grid_spec = pltpu.PrefetchScalarGridSpec(
        num_scalar_prefetch=0,
        grid=(nblk, nblk),
        in_specs=[
            pl.BlockSpec((block, d_pad), lambda i, k: (i, 0)),    # anchor rows
            pl.BlockSpec((d_pad, block), lambda i, k: (0, k)),    # contrast cols (pre-transposed)
            pl.BlockSpec((block, 1), lambda i, k: (i, 0)),        # row labels
            pl.BlockSpec((1, n_pad), lambda i, k: (0, 0)),        # resident col labels
            pl.BlockSpec((block, 1), lambda i, k: (i, 0)),        # coeff
            pl.BlockSpec((block, 1), lambda i, k: (i, 0)),        # beta
        ],
        out_specs=pl.BlockSpec((block, 1), lambda i, k: (i, 0)),   # per-row loss
        scratch_shapes=[pltpu.VMEM((block, 1), jnp.float32)] * 3,  # m, l, ps
    )

    cost = pl.CostEstimate(
        flops=2 * n_pad * n_pad * d_pad,
        transcendentals=n_pad * n_pad,
        # col features re-read once per row block; row features once per block row
        bytes_accessed=(nblk + 1) * n_pad * d_pad * itemsize + 8 * n_pad * 4,
    )

    per_row_loss = pl.pallas_call(
        kernel,
        out_shape=jax.ShapeDtypeStruct((n_pad, 1), jnp.float32),
        grid_spec=grid_spec,
        compiler_params=pltpu.CompilerParams(
            dimension_semantics=("parallel", "arbitrary"),
            vmem_limit_bytes=vmem_limit),
        cost_estimate=cost,
    )(contrast_p, contrast_t, lab_row, lab_col, coeff_p, beta_p)

    # reduction='mean' over the [anchor_count, bsz] view == sum / N (padded rows are 0)
    return jnp.sum(per_row_loss) * (1.0 / n)


def _supcon_loss_ref(features, labels, target_labels, temperature=0.07):
    """Pure-JAX reference mirroring the PyTorch module (reduction='mean')."""
    bsz, n_views = features.shape[0], features.shape[1]
    feat = features.reshape(bsz, n_views, -1).astype(jnp.float32)
    contrast = jnp.transpose(feat, (1, 0, 2)).reshape(n_views * bsz, -1)
    n_total = n_views * bsz
    mask = (labels[:, None] == labels[None, :]).astype(jnp.float32)
    sim = contrast @ contrast.T / temperature
    logits = sim - jnp.max(sim, axis=1, keepdims=True)
    mask = jnp.tile(mask, (n_views, n_views))
    logits_mask = 1.0 - jnp.eye(n_total, dtype=jnp.float32)
    mask = mask * logits_mask
    exp_logits = jnp.exp(logits) * logits_mask
    log_prob = logits - jnp.log(exp_logits.sum(1, keepdims=True))
    mean_log_prob_pos = (mask * log_prob).sum(1) / mask.sum(1)
    loss = -(temperature / temperature) * mean_log_prob_pos
    cmask = jnp.zeros((bsz,), jnp.float32)
    for tc in target_labels:
        cmask = cmask + (labels == tc).astype(jnp.float32)
    loss = cmask[None, :] * loss.reshape(n_views, bsz)
    return loss.mean()


if __name__ == "__main__":
    key = jax.random.PRNGKey(0)
    k1, k2, k3, k4 = jax.random.split(key, 4)

    # Case A: single-tile path (N=16 padded to 128), f32 MXU operands, online-max
    # path; checked at tight tolerance against the f32 reference.
    bsz, n_views, dim = 8, 2, 32
    feats = jax.random.normal(k1, (bsz, n_views, dim), dtype=jnp.float32)
    feats = feats / jnp.linalg.norm(feats, axis=-1, keepdims=True)
    labels = jax.random.randint(k2, (bsz,), 0, 4, dtype=jnp.int32)
    target_labels = [0, 1]

    out = jax.block_until_ready(
        supcon_loss_pallas(feats, labels, target_labels, temperature=0.07,
                           matmul_dtype=jnp.float32, normalized=False))
    ref = _supcon_loss_ref(feats, labels, target_labels, temperature=0.07)
    assert np.allclose(np.asarray(out), np.asarray(ref), rtol=1e-4, atol=1e-4), (out, ref)

    # Case B: multi-block grid (N=192 -> 256 padded, 2x2 grid) exercising the
    # interior fast path, edge masking (diagonal + padded columns) and online
    # accumulation across column blocks.
    bsz2, n_views2, dim2 = 96, 2, 40
    feats2 = jax.random.normal(k3, (bsz2, n_views2, dim2), dtype=jnp.float32)
    feats2 = feats2 / jnp.linalg.norm(feats2, axis=-1, keepdims=True)
    labels2 = jax.random.randint(k4, (bsz2,), 0, 10, dtype=jnp.int32)
    tl2 = [0, 3, 7]
    ref2 = _supcon_loss_ref(feats2, labels2, tl2, temperature=0.07)

    # B1: f32 operands + online max -> tight tolerance vs the f32 reference.
    out2 = jax.block_until_ready(
        supcon_loss_pallas(feats2, labels2, tl2, temperature=0.07, block=128,
                           matmul_dtype=jnp.float32, normalized=False))
    assert np.allclose(np.asarray(out2), np.asarray(ref2), rtol=1e-4, atol=1e-4), (out2, ref2)

    # B2: default bf16 MXU operands + normalized fast path (static max = 1/T).
    # Tight check vs a reference fed the same bf16-rounded features, loose check
    # vs the exact f32 reference (bf16 input quantization).
    out3 = jax.block_until_ready(
        supcon_loss_pallas(feats2, labels2, tl2, temperature=0.07, block=128,
                           normalized=True))
    ref2_q = _supcon_loss_ref(feats2.astype(jnp.bfloat16).astype(jnp.float32),
                              labels2, tl2, temperature=0.07)
    assert np.allclose(np.asarray(out3), np.asarray(ref2_q), rtol=2e-3, atol=2e-3), (out3, ref2_q)
    assert np.allclose(np.asarray(out3), np.asarray(ref2), rtol=5e-2, atol=5e-2), (out3, ref2)

    print("KERNEL_OK")
</pallas_src>

<mosaic_0001>
module attributes {stable_mosaic.version = 11 : i64} {
  func.func @_supcon_kernel(%arg0: i32, %arg1: i32, %arg2: memref<128x128xf32, #tpu.memory_space<vmem>>, %arg3: memref<128x128xf32, #tpu.memory_space<vmem>>, %arg4: memref<128x1xi32, #tpu.memory_space<vmem>>, %arg5: memref<1x128xi32, #tpu.memory_space<vmem>>, %arg6: memref<128x1xf32, #tpu.memory_space<vmem>>, %arg7: memref<128x1xf32, #tpu.memory_space<vmem>>, %arg8: memref<128x1xf32, #tpu.memory_space<vmem>>, %arg9: memref<128x1xf32, #tpu.memory_space<vmem>>, %arg10: memref<128x1xf32, #tpu.memory_space<vmem>>, %arg11: memref<128x1xf32, #tpu.memory_space<vmem>>) attributes {dimension_semantics = [#tpu.dimension_semantics<parallel>, #tpu.dimension_semantics<arbitrary>], iteration_bounds = array<i64: 1, 1>, scalar_prefetch = 0 : i64, scratch_operands = 3 : i64, tpu.core_type = #tpu.core_type<tc>, window_params = [{transform_indices = @transform_0, window_bounds = array<i64: 128, 128>}, {transform_indices = @transform_1, window_bounds = array<i64: 128, 128>}, {transform_indices = @transform_2, window_bounds = array<i64: 128, 1>}, {pipeline_mode = #tpu.pipeline_mode<synchronous>, transform_indices = @transform_3, window_bounds = array<i64: 1, 128>}, {transform_indices = @transform_4, window_bounds = array<i64: 128, 1>}, {transform_indices = @transform_5, window_bounds = array<i64: 128, 1>}, {transform_indices = @transform_6, window_bounds = array<i64: 128, 1>}]} {
    %c0_i32 = arith.constant 0 : i32
    %0 = arith.cmpi eq, %arg1, %c0_i32 : i32
    %1 = arith.extui %0 : i1 to i32
    %c0_i32_0 = arith.constant 0 : i32
    %2 = arith.cmpi ne, %1, %c0_i32_0 : i32
    scf.if %2 {
      %cst_13 = arith.constant -1.000000e+30 : f32
      %27 = vector.broadcast %cst_13 : f32 to vector<128x1xf32>
      %c0_14 = arith.constant 0 : index
      %c0_15 = arith.constant 0 : index
      %28 = vector.load %arg9[%c0_14, %c0_15] : memref<128x1xf32, #tpu.memory_space<vmem>>, vector<128x1xf32>
      tpu.vector_store %arg9[%c0_14, %c0_15], %27 {strides = array<i32>} : memref<128x1xf32, #tpu.memory_space<vmem>>, vector<128x1xf32>,
      %cst_16 = arith.constant 0.000000e+00 : f32
      %29 = vector.broadcast %cst_16 : f32 to vector<128x1xf32>
      %c0_17 = arith.constant 0 : index
      %c0_18 = arith.constant 0 : index
      %30 = vector.load %arg10[%c0_17, %c0_18] : memref<128x1xf32, #tpu.memory_space<vmem>>, vector<128x1xf32>
      tpu.vector_store %arg10[%c0_17, %c0_18], %29 {strides = array<i32>} : memref<128x1xf32, #tpu.memory_space<vmem>>, vector<128x1xf32>,
      %cst_19 = arith.constant 0.000000e+00 : f32
      %31 = vector.broadcast %cst_19 : f32 to vector<128x1xf32>
      %c0_20 = arith.constant 0 : index
      %c0_21 = arith.constant 0 : index
      %32 = vector.load %arg11[%c0_20, %c0_21] : memref<128x1xf32, #tpu.memory_space<vmem>>, vector<128x1xf32>
      tpu.vector_store %arg11[%c0_20, %c0_21], %31 {strides = array<i32>} : memref<128x1xf32, #tpu.memory_space<vmem>>, vector<128x1xf32>,
    } else {
    }
    %c0 = arith.constant 0 : index
    %c0_1 = arith.constant 0 : index
    %3 = vector.load %arg2[%c0, %c0_1] : memref<128x128xf32, #tpu.memory_space<vmem>>, vector<128x128xf32>
    %c0_2 = arith.constant 0 : index
    %c0_3 = arith.constant 0 : index
    %4 = vector.load %arg3[%c0_2, %c0_3] : memref<128x128xf32, #tpu.memory_space<vmem>>, vector<128x128xf32>
    %cst = arith.constant dense<0.000000e+00> : vector<128x128xf32>
    %5 = tpu.matmul %3, %4, %cst {dimension_numbers = #tpu.dot_dimension_numbers<[1], [0], [0], [1], [0, 0, 1, 1], [], []>} : vector<128x128xf32>, vector<128x128xf32>, vector<128x128xf32> -> vector<128x128xf32>
    %cst_4 = arith.constant 14.2857141 : f32
    %6 = vector.broadcast %cst_4 : f32 to vector<128x128xf32>
    %7 = arith.mulf %5, %6 : vector<128x128xf32>
    %c128_i32 = arith.constant 128 : i32
    %8 = arith.muli %arg1, %c128_i32 : i32
    %9 = tpu.assume_multiple %8, 128 : i32
    %c0_5 = arith.constant 0 : index
    %10 = arith.index_cast %9 : i32 to index
    %11 = vector.load %arg5[%c0_5, %10] : memref<1x128xi32, #tpu.memory_space<vmem>>, vector<1x128xi32>
    %c0_6 = arith.constant 0 : index
    %c0_7 = arith.constant 0 : index
    %12 = vector.load %arg4[%c0_6, %c0_7] : memref<128x1xi32, #tpu.memory_space<vmem>>, vector<128x1xi32>
    %13 = vector.broadcast %12 : vector<128x1xi32> to vector<128x128xi32>
    %14 = vector.broadcast %11 : vector<1x128xi32> to vector<128x128xi32>
    %15 = arith.cmpi eq, %13, %14 : vector<128x128xi32>
    %16 = arith.cmpi eq, %arg0, %arg1 : i32
    %c0_i32_8 = arith.constant 0 : i32
    %17 = arith.cmpi eq, %arg1, %c0_i32_8 : i32
    %18 = arith.ori %16, %17 : i1
    %19 = arith.extui %18 : i1 to i32
    %c0_i32_9 = arith.constant 0 : i32
    %20 = arith.cmpi ne, %19, %c0_i32_9 : i32
    scf.if %20 {
      %c128_i32_13 = arith.constant 128 : i32
      %27 = arith.muli %arg0, %c128_i32_13 : i32
      %28 = tpu.iota {dimensions = array<i32: 0>} : vector<128x1xi32>
      %29 = vector.broadcast %27 : i32 to vector<128x1xi32>
      %30 = arith.addi %29, %28 : vector<128x1xi32>
      %31 = tpu.iota {dimensions = array<i32: 1>} : vector<1x128xi32>
      %32 = vector.broadcast %9 : i32 to vector<1x128xi32>
      %33 = arith.addi %32, %31 : vector<1x128xi32>
      %34 = vector.broadcast %30 : vector<128x1xi32> to vector<128x128xi32>
      %35 = vector.broadcast %33 : vector<1x128xi32> to vector<128x128xi32>
      %36 = arith.cmpi ne, %34, %35 : vector<128x128xi32>
      %c16_i32 = arith.constant 16 : i32
      %37 = vector.broadcast %c16_i32 : i32 to vector<1x128xi32>
      %38 = arith.cmpi slt, %33, %37 : vector<1x128xi32>
      %39 = vector.broadcast %38 : vector<1x128xi1> to vector<128x128xi1>
      %40 = arith.andi %36, %39 : vector<128x128xi1>
      %41 = arith.andi %15, %40 : vector<128x128xi1>
      %cst_14 = arith.constant -1.000000e+30 : f32
      %42 = vector.broadcast %cst_14 : f32 to vector<128x128xf32>
      %43 = arith.select %40, %7, %42 : vector<128x128xi1>, vector<128x128xf32>
      %cst_15 = arith.constant dense<0xFF800000> : vector<128xf32>
      %44 = vector.multi_reduction <maximumf>, %43, %cst_15 [1] : vector<128x128xf32> to vector<128xf32>
      %45 = vector.shape_cast %44 : vector<128xf32> to vector<128x1xf32>
      %c0_16 = arith.constant 0 : index
      %c0_17 = arith.constant 0 : index
      %46 = vector.load %arg9[%c0_16, %c0_17] : memref<128x1xf32, #tpu.memory_space<vmem>>, vector<128x1xf32>
      %47 = arith.maximumf %46, %45 : vector<128x1xf32>
      %48 = arith.subf %46, %47 : vector<128x1xf32>
      %49 = math.exp %48 : vector<128x1xf32>
      %50 = vector.broadcast %47 : vector<128x1xf32> to vector<128x128xf32>
      %51 = arith.subf %7, %50 : vector<128x128xf32>
      %52 = math.exp %51 : vector<128x128xf32>
      %cst_18 = arith.constant 0.000000e+00 : f32
      %53 = vector.broadcast %cst_18 : f32 to vector<128x128xf32>
      %54 = arith.select %40, %52, %53 : vector<128x128xi1>, vector<128x128xf32>
      %c0_19 = arith.constant 0 : index
      %c0_20 = arith.constant 0 : index
      %55 = vector.load %arg10[%c0_19, %c0_20] : memref<128x1xf32, #tpu.memory_space<vmem>>, vector<128x1xf32>
      %56 = arith.mulf %49, %55 : vector<128x1xf32>
      %cst_21 = arith.constant dense<0.000000e+00> : vector<128xf32>
      %57 = vector.multi_reduction <add>, %54, %cst_21 [1] : vector<128x128xf32> to vector<128xf32>
      %58 = vector.shape_cast %57 : vector<128xf32> to vector<128x1xf32>
      %59 = arith.addf %56, %58 : vector<128x1xf32>
      %c0_22 = arith.constant 0 : index
      %c0_23 = arith.constant 0 : index
      %60 = vector.load %arg10[%c0_22, %c0_23] : memref<128x1xf32, #tpu.memory_space<vmem>>, vector<128x1xf32>
      tpu.vector_store %arg10[%c0_22, %c0_23], %59 {strides = array<i32>} : memref<128x1xf32, #tpu.memory_space<vmem>>, vector<128x1xf32>,
      %c0_24 = arith.constant 0 : index
      %c0_25 = arith.constant 0 : index
      %61 = vector.load %arg9[%c0_24, %c0_25] : memref<128x1xf32, #tpu.memory_space<vmem>>, vector<128x1xf32>
      tpu.vector_store %arg9[%c0_24, %c0_25], %47 {strides = array<i32>} : memref<128x1xf32, #tpu.memory_space<vmem>>, vector<128x1xf32>,
      %c0_26 = arith.constant 0 : index
      %c0_27 = arith.constant 0 : index
      %62 = vector.load %arg11[%c0_26, %c0_27] : memref<128x1xf32, #tpu.memory_space<vmem>>, vector<128x1xf32>
      %cst_28 = arith.constant 0.000000e+00 : f32
      %63 = vector.broadcast %cst_28 : f32 to vector<128x128xf32>
      %64 = arith.select %41, %7, %63 : vector<128x128xi1>, vector<128x128xf32>
      %cst_29 = arith.constant dense<0.000000e+00> : vector<128xf32>
      %65 = vector.multi_reduction <add>, %64, %cst_29 [1] : vector<128x128xf32> to vector<128xf32>
      %66 = vector.shape_cast %65 : vector<128xf32> to vector<128x1xf32>
      %67 = arith.addf %62, %66 : vector<128x1xf32>
      %c0_30 = arith.constant 0 : index
      %c0_31 = arith.constant 0 : index
      %68 = vector.load %arg11[%c0_30, %c0_31] : memref<128x1xf32, #tpu.memory_space<vmem>>, vector<128x1xf32>
      tpu.vector_store %arg11[%c0_30, %c0_31], %67 {strides = array<i32>} : memref<128x1xf32, #tpu.memory_space<vmem>>, vector<128x1xf32>,
    } else {
    }
    %true = arith.constant true
    %21 = arith.xori %18, %true : i1
    %22 = arith.extui %21 : i1 to i32
    %c0_i32_10 = arith.constant 0 : i32
    %23 = arith.cmpi ne, %22, %c0_i32_10 : i32
    scf.if %23 {
      %cst_13 = arith.constant dense<0xFF800000> : vector<128xf32>
      %27 = vector.multi_reduction <maximumf>, %7, %cst_13 [1] : vector<128x128xf32> to vector<128xf32>
      %28 = vector.shape_cast %27 : vector<128xf32> to vector<128x1xf32>
      %c0_14 = arith.constant 0 : index
      %c0_15 = arith.constant 0 : index
      %29 = vector.load %arg9[%c0_14, %c0_15] : memref<128x1xf32, #tpu.memory_space<vmem>>, vector<128x1xf32>
      %30 = arith.maximumf %29, %28 : vector<128x1xf32>
      %31 = arith.subf %29, %30 : vector<128x1xf32>
      %32 = math.exp %31 : vector<128x1xf32>
      %33 = vector.broadcast %30 : vector<128x1xf32> to vector<128x128xf32>
      %34 = arith.subf %7, %33 : vector<128x128xf32>
      %35 = math.exp %34 : vector<128x128xf32>
      %c0_16 = arith.constant 0 : index
      %c0_17 = arith.constant 0 : index
      %36 = vector.load %arg10[%c0_16, %c0_17] : memref<128x1xf32, #tpu.memory_space<vmem>>, vector<128x1xf32>
      %37 = arith.mulf %32, %36 : vector<128x1xf32>
      %cst_18 = arith.constant dense<0.000000e+00> : vector<128xf32>
      %38 = vector.multi_reduction <add>, %35, %cst_18 [1] : vector<128x128xf32> to vector<128xf32>
      %39 = vector.shape_cast %38 : vector<128xf32> to vector<128x1xf32>
      %40 = arith.addf %37, %39 : vector<128x1xf32>
      %c0_19 = arith.constant 0 : index
      %c0_20 = arith.constant 0 : index
      %41 = vector.load %arg10[%c0_19, %c0_20] : memref<128x1xf32, #tpu.memory_space<vmem>>, vector<128x1xf32>
      tpu.vector_store %arg10[%c0_19, %c0_20], %40 {strides = array<i32>} : memref<128x1xf32, #tpu.memory_space<vmem>>, vector<128x1xf32>,
      %c0_21 = arith.constant 0 : index
      %c0_22 = arith.constant 0 : index
      %42 = vector.load %arg9[%c0_21, %c0_22] : memref<128x1xf32, #tpu.memory_space<vmem>>, vector<128x1xf32>
      tpu.vector_store %arg9[%c0_21, %c0_22], %30 {strides = array<i32>} : memref<128x1xf32, #tpu.memory_space<vmem>>, vector<128x1xf32>,
      %c0_23 = arith.constant 0 : index
      %c0_24 = arith.constant 0 : index
      %43 = vector.load %arg11[%c0_23, %c0_24] : memref<128x1xf32, #tpu.memory_space<vmem>>, vector<128x1xf32>
      %cst_25 = arith.constant 0.000000e+00 : f32
      %44 = vector.broadcast %cst_25 : f32 to vector<128x128xf32>
      %45 = arith.select %15, %7, %44 : vector<128x128xi1>, vector<128x128xf32>
      %cst_26 = arith.constant dense<0.000000e+00> : vector<128xf32>
      %46 = vector.multi_reduction <add>, %45, %cst_26 [1] : vector<128x128xf32> to vector<128xf32>
      %47 = vector.shape_cast %46 : vector<128xf32> to vector<128x1xf32>
      %48 = arith.addf %43, %47 : vector<128x1xf32>
      %c0_27 = arith.constant 0 : index
      %c0_28 = arith.constant 0 : index
      %49 = vector.load %arg11[%c0_27, %c0_28] : memref<128x1xf32, #tpu.memory_space<vmem>>, vector<128x1xf32>
      tpu.vector_store %arg11[%c0_27, %c0_28], %48 {strides = array<i32>} : memref<128x1xf32, #tpu.memory_space<vmem>>, vector<128x1xf32>,
    } else {
    }
    %c0_i32_11 = arith.constant 0 : i32
    %24 = arith.cmpi eq, %arg1, %c0_i32_11 : i32
    %25 = arith.extui %24 : i1 to i32
    %c0_i32_12 = arith.constant 0 : i32
    %26 = arith.cmpi ne, %25, %c0_i32_12 : i32
    scf.if %26 {
      %c0_13 = arith.constant 0 : index
      %c0_14 = arith.constant 0 : index
      %27 = vector.load %arg9[%c0_13, %c0_14] : memref<128x1xf32, #tpu.memory_space<vmem>>, vector<128x1xf32>
      %c0_15 = arith.constant 0 : index
      %c0_16 = arith.constant 0 : index
      %28 = vector.load %arg10[%c0_15, %c0_16] : memref<128x1xf32, #tpu.memory_space<vmem>>, vector<128x1xf32>
      %29 = math.log %28 : vector<128x1xf32>
      %30 = arith.addf %27, %29 : vector<128x1xf32>
      %c0_17 = arith.constant 0 : index
      %c0_18 = arith.constant 0 : index
      %31 = vector.load %arg6[%c0_17, %c0_18] : memref<128x1xf32, #tpu.memory_space<vmem>>, vector<128x1xf32>
      %c0_19 = arith.constant 0 : index
      %c0_20 = arith.constant 0 : index
      %32 = vector.load %arg11[%c0_19, %c0_20] : memref<128x1xf32, #tpu.memory_space<vmem>>, vector<128x1xf32>
      %33 = arith.mulf %31, %32 : vector<128x1xf32>
      %c0_21 = arith.constant 0 : index
      %c0_22 = arith.constant 0 : index
      %34 = vector.load %arg7[%c0_21, %c0_22] : memref<128x1xf32, #tpu.memory_space<vmem>>, vector<128x1xf32>
      %35 = arith.mulf %34, %30 : vector<128x1xf32>
      %36 = arith.subf %33, %35 : vector<128x1xf32>
      %c0_23 = arith.constant 0 : index
      %c0_24 = arith.constant 0 : index
      %37 = vector.load %arg8[%c0_23, %c0_24] : memref<128x1xf32, #tpu.memory_space<vmem>>, vector<128x1xf32>
      tpu.vector_store %arg8[%c0_23, %c0_24], %36 {strides = array<i32>} : memref<128x1xf32, #tpu.memory_space<vmem>>, vector<128x1xf32>,
    } else {
    }
    return
  }
  func.func @transform_0(%arg0: i32, %arg1: i32) -> (i32, i32) {
    %c0_i32 = arith.constant 0 : i32
    %c0_i32_0 = arith.constant 0 : i32
    return %arg0, %c0_i32 : i32, i32
  }
  func.func @transform_1(%arg0: i32, %arg1: i32) -> (i32, i32) {
    %c0_i32 = arith.constant 0 : i32
    %c0_i32_0 = arith.constant 0 : i32
    return %c0_i32, %arg1 : i32, i32
  }
  func.func @transform_2(%arg0: i32, %arg1: i32) -> (i32, i32) {
    %c0_i32 = arith.constant 0 : i32
    %c0_i32_0 = arith.constant 0 : i32
    return %arg0, %c0_i32 : i32, i32
  }
  func.func @transform_3(%arg0: i32, %arg1: i32) -> (i32, i32) {
    %c0_i32 = arith.constant 0 : i32
    %c0_i32_0 = arith.constant 0 : i32
    %c0_i32_1 = arith.constant 0 : i32
    return %c0_i32, %c0_i32_0 : i32, i32
  }
  func.func @transform_4(%arg0: i32, %arg1: i32) -> (i32, i32) {
    %c0_i32 = arith.constant 0 : i32
    %c0_i32_0 = arith.constant 0 : i32
    return %arg0, %c0_i32 : i32, i32
  }
  func.func @transform_5(%arg0: i32, %arg1: i32) -> (i32, i32) {
    %c0_i32 = arith.constant 0 : i32
    %c0_i32_0 = arith.constant 0 : i32
    return %arg0, %c0_i32 : i32, i32
  }
  func.func @transform_6(%arg0: i32, %arg1: i32) -> (i32, i32) {
    %c0_i32 = arith.constant 0 : i32
    %c0_i32_0 = arith.constant 0 : i32
    return %arg0, %c0_i32 : i32, i32
  }
}

</mosaic_0001>

<llo_original>
// kernel: tpu_custom_call.1
$region0: #{tpu_custom_call.1}
  #allocation0 [shape = 'u32[]', space=smem, size = 0x4, offset = 0x4, fixed_abs, tag = 'smem constant byte address 0x4 - core index']
  #allocation1 [shape = 'u32[72,128]{1,0:T(1,128)}', space=vmem, size = 0x9000, scoped, tag = 'internal scratch']
  #allocation2 [shape = 'f32[128,1]{1,0:T(8,128)}', space=vmem, size = 0x10000, scoped, tag = 'scratch operand']
  #allocation3 [shape = 'f32[128,1]{1,0:T(8,128)}', space=vmem, size = 0x10000, scoped, tag = 'scratch operand']
  #allocation4 [shape = 'f32[128,1]{1,0:T(8,128)}', space=vmem, size = 0x10000, scoped, tag = 'scratch operand']
  %s0 = inlined_call_operand.vmem [shape: f32[128,128], index: 0, kind: input, shape index: {}]
  %s1 = inlined_call_operand.vmem [shape: f32[128,128], index: 1, kind: input, shape index: {}]
  %s2 = inlined_call_operand.vmem [shape: s32[128,1], index: 2, kind: input, shape index: {}]
  %s3 = inlined_call_operand.vmem [shape: s32[1,128], index: 3, kind: input, shape index: {}]
  %s4 = inlined_call_operand.vmem [shape: f32[128,1], index: 4, kind: input, shape index: {}]
  %s5 = inlined_call_operand.vmem [shape: f32[128,1], index: 5, kind: input, shape index: {}]
  %s6 = inlined_call_operand.vmem [shape: f32[128,1], index: 6, kind: output, shape index: {}]
  %s7 = sld [smem:[#allocation0]]
  $region50: #{tpu_custom_call.1} parent=0
    _
  %s9 = ssub.s32 1, %s7
  %s10 = scalar_select 0, %s9, %s7
  // Predicated region
  $region2: #{tpu_custom_call.1} parent=0 // pred_check
    _
  $region3: #{tpu_custom_call.1} parent=0 // pred_check_branch
    %12 = sbr.rel (0) target = $region5
  $region4: #{tpu_custom_call.1} parent=0 // pred_region
    _
  $region5: #{tpu_custom_call.1} parent=0 // pred_fallthru
    _
  // Predicated region
  $region6: #{tpu_custom_call.1} parent=0 // pred_check
    _
  $region7: #{tpu_custom_call.1} parent=0 // pred_check_branch
    %14 = sbr.rel (0) target = $region9
  $region8: #{tpu_custom_call.1} parent=0 // pred_region
    _
  $region9: #{tpu_custom_call.1} parent=0 // pred_fallthru
    _
  // Predicated region
  $region10: #{tpu_custom_call.1} parent=0 // pred_check
    _
  $region11: #{tpu_custom_call.1} parent=0 // pred_check_branch
    %16 = sbr.rel (0) target = $region13
  $region12: #{tpu_custom_call.1} parent=0 // pred_region
    _
  $region13: #{tpu_custom_call.1} parent=0 // pred_fallthru
    _
  // Predicated region
  $region14: #{tpu_custom_call.1} parent=0 // pred_check
    _
  $region15: #{tpu_custom_call.1} parent=0 // pred_check_branch
    %18 = sbr.rel (0) target = $region17
  $region16: #{tpu_custom_call.1} parent=0 // pred_region
    _
  $region17: #{tpu_custom_call.1} parent=0 // pred_fallthru
    _
  // Predicated region
  $region18: #{tpu_custom_call.1} parent=0 // pred_check
    _
  $region19: #{tpu_custom_call.1} parent=0 // pred_check_branch
    %20 = sbr.rel (0) target = $region21
  $region20: #{tpu_custom_call.1} parent=0 // pred_region
    _
  $region21: #{tpu_custom_call.1} parent=0 // pred_fallthru
    _
  // Predicated region
  $region22: #{tpu_custom_call.1} parent=0 // pred_check
    _
  $region23: #{tpu_custom_call.1} parent=0 // pred_check_branch
    %22 = sbr.rel (0) target = $region25
  $region24: #{tpu_custom_call.1} parent=0 // pred_region
    _
  $region25: #{tpu_custom_call.1} parent=0 // pred_fallthru
    _
  %p23 = scmp.eq.s32.totalorder 0, 0
  // Predicated region
  $region26: #{tpu_custom_call.1} parent=0 // pred_check
    %p24 = pneg %p23
  $region27: #{tpu_custom_call.1} parent=0 // pred_check_branch
    %26 = sbr.rel (%p24) target = $region29
  $region28: #{tpu_custom_call.1} parent=0 // pred_region
    %vm27 = vcmask 7168
    %28 = vst.msk [vmem:[#allocation2] sm:$0xff] %vm27, -1e+30
    %29 = vst.msk [vmem:[#allocation2 + $0x8] sm:$0xff] %vm27, -1e+30
    %30 = vst.msk [vmem:[#allocation2 + $0x10] sm:$0xff] %vm27, -1e+30
    %31 = vst.msk [vmem:[#allocation2 + $0x18] sm:$0xff] %vm27, -1e+30
    %32 = vst.msk [vmem:[#allocation2 + $0x20] sm:$0xff] %vm27, -1e+30
    %33 = vst.msk [vmem:[#allocation2 + $0x28] sm:$0xff] %vm27, -1e+30
    %34 = vst.msk [vmem:[#allocation2 + $0x30] sm:$0xff] %vm27, -1e+30
    %35 = vst.msk [vmem:[#allocation2 + $0x38] sm:$0xff] %vm27, -1e+30
    %36 = vst.msk [vmem:[#allocation2 + $0x40] sm:$0xff] %vm27, -1e+30
    %37 = vst.msk [vmem:[#allocation2 + $0x48] sm:$0xff] %vm27, -1e+30
    %38 = vst.msk [vmem:[#allocation2 + $0x50] sm:$0xff] %vm27, -1e+30
    %39 = vst.msk [vmem:[#allocation2 + $0x58] sm:$0xff] %vm27, -1e+30
    %40 = vst.msk [vmem:[#allocation2 + $0x60] sm:$0xff] %vm27, -1e+30
    %41 = vst.msk [vmem:[#allocation2 + $0x68] sm:$0xff] %vm27, -1e+30
    %42 = vst.msk [vmem:[#allocation2 + $0x70] sm:$0xff] %vm27, -1e+30
    %43 = vst.msk [vmem:[#allocation2 + $0x78] sm:$0xff] %vm27, -1e+30
    %44 = vst.msk [vmem:[#allocation3] sm:$0xff] %vm27, 0.0
    %45 = vst.msk [vmem:[#allocation3 + $0x8] sm:$0xff] %vm27, 0.0
    %46 = vst.msk [vmem:[#allocation3 + $0x10] sm:$0xff] %vm27, 0.0
    %47 = vst.msk [vmem:[#allocation3 + $0x18] sm:$0xff] %vm27, 0.0
    %48 = vst.msk [vmem:[#allocation3 + $0x20] sm:$0xff] %vm27, 0.0
    %49 = vst.msk [vmem:[#allocation3 + $0x28] sm:$0xff] %vm27, 0.0
    %50 = vst.msk [vmem:[#allocation3 + $0x30] sm:$0xff] %vm27, 0.0
    %51 = vst.msk [vmem:[#allocation3 + $0x38] sm:$0xff] %vm27, 0.0
    %52 = vst.msk [vmem:[#allocation3 + $0x40] sm:$0xff] %vm27, 0.0
    %53 = vst.msk [vmem:[#allocation3 + $0x48] sm:$0xff] %vm27, 0.0
    %54 = vst.msk [vmem:[#allocation3 + $0x50] sm:$0xff] %vm27, 0.0
    %55 = vst.msk [vmem:[#allocation3 + $0x58] sm:$0xff] %vm27, 0.0
    %56 = vst.msk [vmem:[#allocation3 + $0x60] sm:$0xff] %vm27, 0.0
    %57 = vst.msk [vmem:[#allocation3 + $0x68] sm:$0xff] %vm27, 0.0
    %58 = vst.msk [vmem:[#allocation3 + $0x70] sm:$0xff] %vm27, 0.0
    %59 = vst.msk [vmem:[#allocation3 + $0x78] sm:$0xff] %vm27, 0.0
    %60 = vst.msk [vmem:[#allocation4] sm:$0xff] %vm27, 0.0
    %61 = vst.msk [vmem:[#allocation4 + $0x8] sm:$0xff] %vm27, 0.0
    %62 = vst.msk [vmem:[#allocation4 + $0x10] sm:$0xff] %vm27, 0.0
    %63 = vst.msk [vmem:[#allocation4 + $0x18] sm:$0xff] %vm27, 0.0
    %64 = vst.msk [vmem:[#allocation4 + $0x20] sm:$0xff] %vm27, 0.0
    %65 = vst.msk [vmem:[#allocation4 + $0x28] sm:$0xff] %vm27, 0.0
    %66 = vst.msk [vmem:[#allocation4 + $0x30] sm:$0xff] %vm27, 0.0
    %67 = vst.msk [vmem:[#allocation4 + $0x38] sm:$0xff] %vm27, 0.0
    %68 = vst.msk [vmem:[#allocation4 + $0x40] sm:$0xff] %vm27, 0.0
    %69 = vst.msk [vmem:[#allocation4 + $0x48] sm:$0xff] %vm27, 0.0
    %70 = vst.msk [vmem:[#allocation4 + $0x50] sm:$0xff] %vm27, 0.0
    %71 = vst.msk [vmem:[#allocation4 + $0x58] sm:$0xff] %vm27, 0.0
    %72 = vst.msk [vmem:[#allocation4 + $0x60] sm:$0xff] %vm27, 0.0
    %73 = vst.msk [vmem:[#allocation4 + $0x68] sm:$0xff] %vm27, 0.0
    %74 = vst.msk [vmem:[#allocation4 + $0x70] sm:$0xff] %vm27, 0.0
    %75 = vst.msk [vmem:[#allocation4 + $0x78] sm:$0xff] %vm27, 0.0
  $region29: #{tpu_custom_call.1} parent=0 // pred_fallthru
    _
  %v76 = vld [vmem:[%s0] sm:$0xff]
  %v77 = vld [vmem:[%s0 + $0x8] sm:$0xff]
  %v78 = vld [vmem:[%s0 + $0x10] sm:$0xff]
  %v79 = vld [vmem:[%s0 + $0x18] sm:$0xff]
  %v80 = vld [vmem:[%s0 + $0x20] sm:$0xff]
  %v81 = vld [vmem:[%s0 + $0x28] sm:$0xff]
  %v82 = vld [vmem:[%s0 + $0x30] sm:$0xff]
  %v83 = vld [vmem:[%s0 + $0x38] sm:$0xff]
  %v84 = vld [vmem:[%s0 + $0x40] sm:$0xff]
  %v85 = vld [vmem:[%s0 + $0x48] sm:$0xff]
  %v86 = vld [vmem:[%s0 + $0x50] sm:$0xff]
  %v87 = vld [vmem:[%s0 + $0x58] sm:$0xff]
  %v88 = vld [vmem:[%s0 + $0x60] sm:$0xff]
  %v89 = vld [vmem:[%s0 + $0x68] sm:$0xff]
  %v90 = vld [vmem:[%s0 + $0x70] sm:$0xff]
  %v91 = vld [vmem:[%s0 + $0x78] sm:$0xff]
  %v92 = vld [vmem:[%s1] sm:$0xff]
  %v93 = vld [vmem:[%s1 + $0x8] sm:$0xff]
  %v94 = vld [vmem:[%s1 + $0x10] sm:$0xff]
  %v95 = vld [vmem:[%s1 + $0x18] sm:$0xff]
  %v96 = vld [vmem:[%s1 + $0x20] sm:$0xff]
  %v97 = vld [vmem:[%s1 + $0x28] sm:$0xff]
  %v98 = vld [vmem:[%s1 + $0x30] sm:$0xff]
  %v99 = vld [vmem:[%s1 + $0x38] sm:$0xff]
  %v100 = vld [vmem:[%s1 + $0x40] sm:$0xff]
  %v101 = vld [vmem:[%s1 + $0x48] sm:$0xff]
  %v102 = vld [vmem:[%s1 + $0x50] sm:$0xff]
  %v103 = vld [vmem:[%s1 + $0x58] sm:$0xff]
  %v104 = vld [vmem:[%s1 + $0x60] sm:$0xff]
  %v105 = vld [vmem:[%s1 + $0x68] sm:$0xff]
  %v106 = vld [vmem:[%s1 + $0x70] sm:$0xff]
  %v107 = vld [vmem:[%s1 + $0x78] sm:$0xff]
  %108 = vmatpush.msra.mxu0 %v107
  %109 = vmatpush.msra.mxu0 %v106
  %110 = vmatpush.msra.mxu0 %v105
  %111 = vmatpush.msra.mxu0 %v104
  %112 = vmatpush.msra.mxu0 %v103
  %113 = vmatpush.msra.mxu0 %v102
  %114 = vmatpush.msra.mxu0 %v101
  %115 = vmatpush.msra.mxu0 %v100
  %116 = vmatpush.msra.mxu0 %v99
  %117 = vmatpush.msra.mxu0 %v98
  %118 = vmatpush.msra.mxu0 %v97
  %119 = vmatpush.msra.mxu0 %v96
  %120 = vmatpush.msra.mxu0 %v95
  %121 = vmatpush.msra.mxu0 %v94
  %122 = vmatpush.msra.mxu0 %v93
  %123 = vmatpush.msra.mxu0 %v92
  %124 = vmatmul.f32.gmra.mxu0 %v76
  %v125 = vpop.f32.mrf.mxu0
  %v126 = vadd.f32 0.0, %v125
  %127 = vmatmul.f32.gmra.mxu0 %v77
  %v128 = vpop.f32.mrf.mxu0
  %v129 = vadd.f32 0.0, %v128
  %130 = vmatmul.f32.gmra.mxu0 %v78
  %v131 = vpop.f32.mrf.mxu0
  %v132 = vadd.f32 0.0, %v131
  %133 = vmatmul.f32.gmra.mxu0 %v79
  %v134 = vpop.f32.mrf.mxu0
  %v135 = vadd.f32 0.0, %v134
  %136 = vmatmul.f32.gmra.mxu0 %v80
  %v137 = vpop.f32.mrf.mxu0
  %v138 = vadd.f32 0.0, %v137
  %139 = vmatmul.f32.gmra.mxu0 %v81
  %v140 = vpop.f32.mrf.mxu0
  %v141 = vadd.f32 0.0, %v140
  %142 = vmatmul.f32.gmra.mxu0 %v82
  %v143 = vpop.f32.mrf.mxu0
  %v144 = vadd.f32 0.0, %v143
  %145 = vmatmul.f32.gmra.mxu0 %v83
  %v146 = vpop.f32.mrf.mxu0
  %v147 = vadd.f32 0.0, %v146
  %148 = vmatmul.f32.gmra.mxu0 %v84
  %v149 = vpop.f32.mrf.mxu0
  %v150 = vadd.f32 0.0, %v149
  %151 = vmatmul.f32.gmra.mxu0 %v85
  %v152 = vpop.f32.mrf.mxu0
  %v153 = vadd.f32 0.0, %v152
  %154 = vmatmul.f32.gmra.mxu0 %v86
  %v155 = vpop.f32.mrf.mxu0
  %v156 = vadd.f32 0.0, %v155
  %157 = vmatmul.f32.gmra.mxu0 %v87
  %v158 = vpop.f32.mrf.mxu0
  %v159 = vadd.f32 0.0, %v158
  %160 = vmatmul.f32.gmra.mxu0 %v88
  %v161 = vpop.f32.mrf.mxu0
  %v162 = vadd.f32 0.0, %v161
  %163 = vmatmul.f32.gmra.mxu0 %v89
  %v164 = vpop.f32.mrf.mxu0
  %v165 = vadd.f32 0.0, %v164
  %166 = vmatmul.f32.gmra.mxu0 %v90
  %v167 = vpop.f32.mrf.mxu0
  %v168 = vadd.f32 0.0, %v167
  %169 = vmatmul.f32.gmra.mxu0 %v91
  %v170 = vpop.f32.mrf.mxu0
  %v171 = vadd.f32 0.0, %v170
  %172 = vdwg.mxu0
  %v173 = vmul.f32 %v126, 14.285714
  %v174 = vmul.f32 %v129, 14.285714
  %v175 = vmul.f32 %v132, 14.285714
  %v176 = vmul.f32 %v135, 14.285714
  %v177 = vmul.f32 %v138, 14.285714
  %v178 = vmul.f32 %v141, 14.285714
  %v179 = vmul.f32 %v144, 14.285714
  %v180 = vmul.f32 %v147, 14.285714
  %v181 = vmul.f32 %v150, 14.285714
  %v182 = vmul.f32 %v153, 14.285714
  %v183 = vmul.f32 %v156, 14.285714
  %v184 = vmul.f32 %v159, 14.285714
  %v185 = vmul.f32 %v162, 14.285714
  %v186 = vmul.f32 %v165, 14.285714
  %v187 = vmul.f32 %v168, 14.285714
  %v188 = vmul.f32 %v171, 14.285714
  %s189 = smul.u32 0, 128
  %s190 = sshra.s32 %s189, 7
  %s191 = sand.u32 %s189, 127
  %s192 = scalar_lea.vmem %s3, %s190
  %v193 = vld [vmem:[%s192] sm:$0x1]
  %v194 = vld [vmem:[%s2] sm:$0xff]
  %v195 = vld [vmem:[%s2 + $0x8] sm:$0xff]
  %v196 = vld [vmem:[%s2 + $0x10] sm:$0xff]
  %v197 = vld [vmem:[%s2 + $0x18] sm:$0xff]
  %v198 = vld [vmem:[%s2 + $0x20] sm:$0xff]
  %v199 = vld [vmem:[%s2 + $0x28] sm:$0xff]
  %v200 = vld [vmem:[%s2 + $0x30] sm:$0xff]
  %v201 = vld [vmem:[%s2 + $0x38] sm:$0xff]
  %v202 = vld [vmem:[%s2 + $0x40] sm:$0xff]
  %v203 = vld [vmem:[%s2 + $0x48] sm:$0xff]
  %v204 = vld [vmem:[%s2 + $0x50] sm:$0xff]
  %v205 = vld [vmem:[%s2 + $0x58] sm:$0xff]
  %v206 = vld [vmem:[%s2 + $0x60] sm:$0xff]
  %v207 = vld [vmem:[%s2 + $0x68] sm:$0xff]
  %v208 = vld [vmem:[%s2 + $0x70] sm:$0xff]
  %v209 = vld [vmem:[%s2 + $0x78] sm:$0xff]
  %210 = vset.pattern.permute.xlu0 0
  %211 = vperm.xlu0 %210, %v194
  %v212 = vpop.permute.xlu0 %211
  %213 = vset.pattern.permute.xlu0 0
  %214 = vperm.xlu0 %213, %v195
  %v215 = vpop.permute.xlu0 %214
  %216 = vset.pattern.permute.xlu0 0
  %217 = vperm.xlu0 %216, %v196
  %v218 = vpop.permute.xlu0 %217
  %219 = vset.pattern.permute.xlu0 0
  %220 = vperm.xlu0 %219, %v197
  %v221 = vpop.permute.xlu0 %220
  %222 = vset.pattern.permute.xlu0 0
  %223 = vperm.xlu0 %222, %v198
  %v224 = vpop.permute.xlu0 %223
  %225 = vset.pattern.permute.xlu0 0
  %226 = vperm.xlu0 %225, %v199
  %v227 = vpop.permute.xlu0 %226
  %228 = vset.pattern.permute.xlu0 0
  %229 = vperm.xlu0 %228, %v200
  %v230 = vpop.permute.xlu0 %229
  %231 = vset.pattern.permute.xlu0 0
  %232 = vperm.xlu0 %231, %v201
  %v233 = vpop.permute.xlu0 %232
  %234 = vset.pattern.permute.xlu0 0
  %235 = vperm.xlu0 %234, %v202
  %v236 = vpop.permute.xlu0 %235
  %237 = vset.pattern.permute.xlu0 0
  %238 = vperm.xlu0 %237, %v203
  %v239 = vpop.permute.xlu0 %238
  %240 = vset.pattern.permute.xlu0 0
  %241 = vperm.xlu0 %240, %v204
  %v242 = vpop.permute.xlu0 %241
  %243 = vset.pattern.permute.xlu0 0
  %244 = vperm.xlu0 %243, %v205
  %v245 = vpop.permute.xlu0 %244
  %246 = vset.pattern.permute.xlu0 0
  %247 = vperm.xlu0 %246, %v206
  %v248 = vpop.permute.xlu0 %247
  %249 = vset.pattern.permute.xlu0 0
  %250 = vperm.xlu0 %249, %v207
  %v251 = vpop.permute.xlu0 %250
  %252 = vset.pattern.permute.xlu0 0
  %253 = vperm.xlu0 %252, %v208
  %v254 = vpop.permute.xlu0 %253
  %255 = vset.pattern.permute.xlu0 0
  %256 = vperm.xlu0 %255, %v209
  %v257 = vpop.permute.xlu0 %256
  %v258 = vperm.slane %v193, 0
  %vm259 = vcmp.eq.s32.totalorder %v212, %v258
  %vm260 = vcmp.eq.s32.totalorder %v215, %v258
  %vm261 = vcmp.eq.s32.totalorder %v218, %v258
  %vm262 = vcmp.eq.s32.totalorder %v221, %v258
  %vm263 = vcmp.eq.s32.totalorder %v224, %v258
  %vm264 = vcmp.eq.s32.totalorder %v227, %v258
  %vm265 = vcmp.eq.s32.totalorder %v230, %v258
  %vm266 = vcmp.eq.s32.totalorder %v233, %v258
  %vm267 = vcmp.eq.s32.totalorder %v236, %v258
  %vm268 = vcmp.eq.s32.totalorder %v239, %v258
  %vm269 = vcmp.eq.s32.totalorder %v242, %v258
  %vm270 = vcmp.eq.s32.totalorder %v245, %v258
  %vm271 = vcmp.eq.s32.totalorder %v248, %v258
  %vm272 = vcmp.eq.s32.totalorder %v251, %v258
  %vm273 = vcmp.eq.s32.totalorder %v254, %v258
  %vm274 = vcmp.eq.s32.totalorder %v257, %v258
  %p275 = scmp.eq.s32.totalorder 0, 0
  %p276 = por %p275, %p23
  // Predicated region
  $region30: #{tpu_custom_call.1} parent=0 // pred_check
    %p277 = pneg %p276
  $region31: #{tpu_custom_call.1} parent=0 // pred_check_branch
    %279 = sbr.rel (%p277) target = $region33
  $region32: #{tpu_custom_call.1} parent=0 // pred_region
    %s280 = smul.u32 0, 128
    %v281 = vlaneseq
    %v282 = vshrl.u32 %v281, 7
    %v283 = vadd.s32 %v282, 8
    %v284 = vadd.s32 %v282, 16
    %v285 = vadd.s32 %v282, 24
    %v286 = vadd.s32 %v282, 32
    %v287 = vadd.s32 %v282, 40
    %v288 = vadd.s32 %v282, 48
    %v289 = vadd.s32 %v282, 56
    %v290 = vadd.s32 %v282, 64
    %v291 = vadd.s32 %v282, 72
    %v292 = vadd.s32 %v282, 80
    %v293 = vadd.s32 %v282, 88
    %v294 = vadd.s32 %v282, 96
    %v295 = vadd.s32 %v282, 104
    %v296 = vadd.s32 %v282, 112
    %v297 = vadd.s32 %v282, 120
    %v298 = vstv %s280
    %v299 = vadd.s32 %v298, %v282
    %v300 = vadd.s32 %v298, %v283
    %v301 = vadd.s32 %v298, %v284
    %v302 = vadd.s32 %v298, %v285
    %v303 = vadd.s32 %v298, %v286
    %v304 = vadd.s32 %v298, %v287
    %v305 = vadd.s32 %v298, %v288
    %v306 = vadd.s32 %v298, %v289
    %v307 = vadd.s32 %v298, %v290
    %v308 = vadd.s32 %v298, %v291
    %v309 = vadd.s32 %v298, %v292
    %v310 = vadd.s32 %v298, %v293
    %v311 = vadd.s32 %v298, %v294
    %v312 = vadd.s32 %v298, %v295
    %v313 = vadd.s32 %v298, %v296
    %v314 = vadd.s32 %v298, %v297
    %v315 = vlaneseq
    %v316 = vand.u32 %v315, 127
    %v317 = vstv %s189
    %v318 = vadd.s32 %v317, %v316
    %vm319 = vcmp.ne.s32.totalorder %v299, %v318
    %vm320 = vcmp.ne.s32.totalorder %v300, %v318
    %vm321 = vcmp.ne.s32.totalorder %v301, %v318
    %vm322 = vcmp.ne.s32.totalorder %v302, %v318
    %vm323 = vcmp.ne.s32.totalorder %v303, %v318
    %vm324 = vcmp.ne.s32.totalorder %v304, %v318
    %vm325 = vcmp.ne.s32.totalorder %v305, %v318
    %vm326 = vcmp.ne.s32.totalorder %v306, %v318
    %vm327 = vcmp.ne.s32.totalorder %v307, %v318
    %vm328 = vcmp.ne.s32.totalorder %v308, %v318
    %vm329 = vcmp.ne.s32.totalorder %v309, %v318
    %vm330 = vcmp.ne.s32.totalorder %v310, %v318
    %vm331 = vcmp.ne.s32.totalorder %v311, %v318
    %vm332 = vcmp.ne.s32.totalorder %v312, %v318
    %vm333 = vcmp.ne.s32.totalorder %v313, %v318
    %vm334 = vcmp.ne.s32.totalorder %v314, %v318
    %vm335 = vcmp.lt.s32.totalorder %v318, 16
    %v336 = vsel %vm335, 1, 0
    %vm337 = vcmp.eq.s32.totalorder %v336, 1
    %vm338 = vmand %vm319, %vm337
    %vm339 = vmand %vm320, %vm337
    %vm340 = vmand %vm321, %vm337
    %vm341 = vmand %vm322, %vm337
    %vm342 = vmand %vm323, %vm337
    %vm343 = vmand %vm324, %vm337
    %vm344 = vmand %vm325, %vm337
    %vm345 = vmand %vm326, %vm337
    %vm346 = vmand %vm327, %vm337
    %vm347 = vmand %vm328, %vm337
    %vm348 = vmand %vm329, %vm337
    %vm349 = vmand %vm330, %vm337
    %vm350 = vmand %vm331, %vm337
    %vm351 = vmand %vm332, %vm337
    %vm352 = vmand %vm333, %vm337
    %vm353 = vmand %vm334, %vm337
    %vm354 = vmand %vm259, %vm338
    %vm355 = vmand %vm260, %vm339
    %vm356 = vmand %vm261, %vm340
    %vm357 = vmand %vm262, %vm341
    %vm358 = vmand %vm263, %vm342
    %vm359 = vmand %vm264, %vm343
    %vm360 = vmand %vm265, %vm344
    %vm361 = vmand %vm266, %vm345
    %vm362 = vmand %vm267, %vm346
    %vm363 = vmand %vm268, %vm347
    %vm364 = vmand %vm269, %vm348
    %vm365 = vmand %vm270, %vm349
    %vm366 = vmand %vm271, %vm350
    %vm367 = vmand %vm272, %vm351
    %vm368 = vmand %vm273, %vm352
    %vm369 = vmand %vm274, %vm353
    %v370 = vsel %vm338, %v173, -1e+30
    %v371 = vsel %vm339, %v174, -1e+30
    %v372 = vsel %vm340, %v175, -1e+30
    %v373 = vsel %vm341, %v176, -1e+30
    %v374 = vsel %vm342, %v177, -1e+30
    %v375 = vsel %vm343, %v178, -1e+30
    %v376 = vsel %vm344, %v179, -1e+30
    %v377 = vsel %vm345, %v180, -1e+30
    %v378 = vsel %vm346, %v181, -1e+30
    %v379 = vsel %vm347, %v182, -1e+30
    %v380 = vsel %vm348, %v183, -1e+30
    %v381 = vsel %vm349, %v184, -1e+30
    %v382 = vsel %vm350, %v185, -1e+30
    %v383 = vsel %vm351, %v186, -1e+30
    %v384 = vsel %vm352, %v187, -1e+30
    %v385 = vsel %vm353, %v188, -1e+30
    %386 = vmax.xlane.f32.xlu0 %v370
    %v387 = vpop.xlane.xlu0 %386
    %388 = vmax.xlane.f32.xlu0 %v371
    %v389 = vpop.xlane.xlu0 %388
    %390 = vmax.xlane.f32.xlu0 %v372
    %v391 = vpop.xlane.xlu0 %390
    %392 = vmax.xlane.f32.xlu0 %v373
    %v393 = vpop.xlane.xlu0 %392
    %394 = vmax.xlane.f32.xlu0 %v374
    %v395 = vpop.xlane.xlu0 %394
    %396 = vmax.xlane.f32.xlu0 %v375
    %v397 = vpop.xlane.xlu0 %396
    %398 = vmax.xlane.f32.xlu0 %v376
    %v399 = vpop.xlane.xlu0 %398
    %400 = vmax.xlane.f32.xlu0 %v377
    %v401 = vpop.xlane.xlu0 %400
    %402 = vmax.xlane.f32.xlu0 %v378
    %v403 = vpop.xlane.xlu0 %402
    %404 = vmax.xlane.f32.xlu0 %v379
    %v405 = vpop.xlane.xlu0 %404
    %406 = vmax.xlane.f32.xlu0 %v380
    %v407 = vpop.xlane.xlu0 %406
    %408 = vmax.xlane.f32.xlu0 %v381
    %v409 = vpop.xlane.xlu0 %408
    %410 = vmax.xlane.f32.xlu0 %v382
    %v411 = vpop.xlane.xlu0 %410
    %412 = vmax.xlane.f32.xlu0 %v383
    %v413 = vpop.xlane.xlu0 %412
    %414 = vmax.xlane.f32.xlu0 %v384
    %v415 = vpop.xlane.xlu0 %414
    %416 = vmax.xlane.f32.xlu0 %v385
    %v417 = vpop.xlane.xlu0 %416
    %v418 = vld [vmem:[#allocation2] sm:$0xff]
    %v419 = vld [vmem:[#allocation2 + $0x8] sm:$0xff]
    %v420 = vld [vmem:[#allocation2 + $0x10] sm:$0xff]
    %v421 = vld [vmem:[#allocation2 + $0x18] sm:$0xff]
    %v422 = vld [vmem:[#allocation2 + $0x20] sm:$0xff]
    %v423 = vld [vmem:[#allocation2 + $0x28] sm:$0xff]
    %v424 = vld [vmem:[#allocation2 + $0x30] sm:$0xff]
    %v425 = vld [vmem:[#allocation2 + $0x38] sm:$0xff]
    %v426 = vld [vmem:[#allocation2 + $0x40] sm:$0xff]
    %v427 = vld [vmem:[#allocation2 + $0x48] sm:$0xff]
    %v428 = vld [vmem:[#allocation2 + $0x50] sm:$0xff]
    %v429 = vld [vmem:[#allocation2 + $0x58] sm:$0xff]
    %v430 = vld [vmem:[#allocation2 + $0x60] sm:$0xff]
    %v431 = vld [vmem:[#allocation2 + $0x68] sm:$0xff]
    %v432 = vld [vmem:[#allocation2 + $0x70] sm:$0xff]
    %v433 = vld [vmem:[#allocation2 + $0x78] sm:$0xff]
    %v434 = vmax.f32 %v418, %v387
    %v435 = vmax.f32 %v419, %v389
    %v436 = vmax.f32 %v420, %v391
    %v437 = vmax.f32 %v421, %v393
    %v438 = vmax.f32 %v422, %v395
    %v439 = vmax.f32 %v423, %v397
    %v440 = vmax.f32 %v424, %v399
    %v441 = vmax.f32 %v425, %v401
    %v442 = vmax.f32 %v426, %v403
    %v443 = vmax.f32 %v427, %v405
    %v444 = vmax.f32 %v428, %v407
    %v445 = vmax.f32 %v429, %v409
    %v446 = vmax.f32 %v430, %v411
    %v447 = vmax.f32 %v431, %v413
    %v448 = vmax.f32 %v432, %v415
    %v449 = vmax.f32 %v433, %v417
    %v450 = vsub.f32 %v418, %v434
    %v451 = vsub.f32 %v419, %v435
    %v452 = vsub.f32 %v420, %v436
    %v453 = vsub.f32 %v421, %v437
    %v454 = vsub.f32 %v422, %v438
    %v455 = vsub.f32 %v423, %v439
    %v456 = vsub.f32 %v424, %v440
    %v457 = vsub.f32 %v425, %v441
    %v458 = vsub.f32 %v426, %v442
    %v459 = vsub.f32 %v427, %v443
    %v460 = vsub.f32 %v428, %v444
    %v461 = vsub.f32 %v429, %v445
    %v462 = vsub.f32 %v430, %v446
    %v463 = vsub.f32 %v431, %v447
    %v464 = vsub.f32 %v432, %v448
    %v465 = vsub.f32 %v433, %v449
    %v466 = vmul.f32 %v450, 1.442695
    %v467 = vpow.pop %v466
    %v468 = vmul.f32 %v451, 1.442695
    %v469 = vpow.pop %v468
    %v470 = vmul.f32 %v452, 1.442695
    %v471 = vpow.pop %v470
    %v472 = vmul.f32 %v453, 1.442695
    %v473 = vpow.pop %v472
    %v474 = vmul.f32 %v454, 1.442695
    %v475 = vpow.pop %v474
    %v476 = vmul.f32 %v455, 1.442695
    %v477 = vpow.pop %v476
    %v478 = vmul.f32 %v456, 1.442695
    %v479 = vpow.pop %v478
    %v480 = vmul.f32 %v457, 1.442695
    %v481 = vpow.pop %v480
    %v482 = vmul.f32 %v458, 1.442695
    %v483 = vpow.pop %v482
    %v484 = vmul.f32 %v459, 1.442695
    %v485 = vpow.pop %v484
    %v486 = vmul.f32 %v460, 1.442695
    %v487 = vpow.pop %v486
    %v488 = vmul.f32 %v461, 1.442695
    %v489 = vpow.pop %v488
    %v490 = vmul.f32 %v462, 1.442695
    %v491 = vpow.pop %v490
    %v492 = vmul.f32 %v463, 1.442695
    %v493 = vpow.pop %v492
    %v494 = vmul.f32 %v464, 1.442695
    %v495 = vpow.pop %v494
    %v496 = vmul.f32 %v465, 1.442695
    %v497 = vpow.pop %v496
    %499 = vset.pattern.permute.xlu0 0
    %500 = vperm.xlu0 %499, %v434
    %v501 = vpop.permute.xlu0 %500
    %504 = vset.pattern.permute.xlu0 0
    %505 = vperm.xlu0 %504, %v435
    %v506 = vpop.permute.xlu0 %505
    %509 = vset.pattern.permute.xlu0 0
    %510 = vperm.xlu0 %509, %v436
    %v511 = vpop.permute.xlu0 %510
    %514 = vset.pattern.permute.xlu0 0
    %515 = vperm.xlu0 %514, %v437
    %v516 = vpop.permute.xlu0 %515
    %519 = vset.pattern.permute.xlu0 0
    %520 = vperm.xlu0 %519, %v438
    %v521 = vpop.permute.xlu0 %520
    %524 = vset.pattern.permute.xlu0 0
    %525 = vperm.xlu0 %524, %v439
    %v526 = vpop.permute.xlu0 %525
    %529 = vset.pattern.permute.xlu0 0
    %530 = vperm.xlu0 %529, %v440
    %v531 = vpop.permute.xlu0 %530
    %534 = vset.pattern.permute.xlu0 0
    %535 = vperm.xlu0 %534, %v441
    %v536 = vpop.permute.xlu0 %535
    %539 = vset.pattern.permute.xlu0 0
    %540 = vperm.xlu0 %539, %v442
    %v541 = vpop.permute.xlu0 %540
    %544 = vset.pattern.permute.xlu0 0
    %545 = vperm.xlu0 %544, %v443
    %v546 = vpop.permute.xlu0 %545
    %549 = vset.pattern.permute.xlu0 0
    %550 = vperm.xlu0 %549, %v444
    %v551 = vpop.permute.xlu0 %550
    %554 = vset.pattern.permute.xlu0 0
    %555 = vperm.xlu0 %554, %v445
    %v556 = vpop.permute.xlu0 %555
    %559 = vset.pattern.permute.xlu0 0
    %560 = vperm.xlu0 %559, %v446
    %v561 = vpop.permute.xlu0 %560
    %564 = vset.pattern.permute.xlu0 0
    %565 = vperm.xlu0 %564, %v447
    %v566 = vpop.permute.xlu0 %565
    %569 = vset.pattern.permute.xlu0 0
    %570 = vperm.xlu0 %569, %v448
    %v571 = vpop.permute.xlu0 %570
    %574 = vset.pattern.permute.xlu0 0
    %575 = vperm.xlu0 %574, %v449
    %v576 = vpop.permute.xlu0 %575
    %v578 = vsub.f32 %v173, %v501
    %v579 = vsub.f32 %v174, %v506
    %v580 = vsub.f32 %v175, %v511
    %v581 = vsub.f32 %v176, %v516
    %v582 = vsub.f32 %v177, %v521
    %v583 = vsub.f32 %v178, %v526
    %v584 = vsub.f32 %v179, %v531
    %v585 = vsub.f32 %v180, %v536
    %v586 = vsub.f32 %v181, %v541
    %v587 = vsub.f32 %v182, %v546
    %v588 = vsub.f32 %v183, %v551
    %v589 = vsub.f32 %v184, %v556
    %v590 = vsub.f32 %v185, %v561
    %v591 = vsub.f32 %v186, %v566
    %v592 = vsub.f32 %v187, %v571
    %v593 = vsub.f32 %v188, %v576
    %v594 = vmul.f32 %v578, 1.442695
    %v595 = vpow.pop %v594
    %v596 = vmul.f32 %v579, 1.442695
    %v597 = vpow.pop %v596
    %v598 = vmul.f32 %v580, 1.442695
    %v599 = vpow.pop %v598
    %v600 = vmul.f32 %v581, 1.442695
    %v601 = vpow.pop %v600
    %v602 = vmul.f32 %v582, 1.442695
    %v603 = vpow.pop %v602
    %v604 = vmul.f32 %v583, 1.442695
    %v605 = vpow.pop %v604
    %v606 = vmul.f32 %v584, 1.442695
    %v607 = vpow.pop %v606
    %v608 = vmul.f32 %v585, 1.442695
    %v609 = vpow.pop %v608
    %v610 = vmul.f32 %v586, 1.442695
    %v611 = vpow.pop %v610
    %v612 = vmul.f32 %v587, 1.442695
    %v613 = vpow.pop %v612
    %v614 = vmul.f32 %v588, 1.442695
    %v615 = vpow.pop %v614
    %v616 = vmul.f32 %v589, 1.442695
    %v617 = vpow.pop %v616
    %v618 = vmul.f32 %v590, 1.442695
    %v619 = vpow.pop %v618
    %v620 = vmul.f32 %v591, 1.442695
    %v621 = vpow.pop %v620
    %v622 = vmul.f32 %v592, 1.442695
    %v623 = vpow.pop %v622
    %v624 = vmul.f32 %v593, 1.442695
    %v625 = vpow.pop %v624
    %v626 = vsel %vm338, %v595, 0.0
    %v627 = vsel %vm339, %v597, 0.0
    %v628 = vsel %vm340, %v599, 0.0
    %v629 = vsel %vm341, %v601, 0.0
    %v630 = vsel %vm342, %v603, 0.0
    %v631 = vsel %vm343, %v605, 0.0
    %v632 = vsel %vm344, %v607, 0.0
    %v633 = vsel %vm345, %v609, 0.0
    %v634 = vsel %vm346, %v611, 0.0
    %v635 = vsel %vm347, %v613, 0.0
    %v636 = vsel %vm348, %v615, 0.0
    %v637 = vsel %vm349, %v617, 0.0
    %v638 = vsel %vm350, %v619, 0.0
    %v639 = vsel %vm351, %v621, 0.0
    %v640 = vsel %vm352, %v623, 0.0
    %v641 = vsel %vm353, %v625, 0.0
    %v642 = vld [vmem:[#allocation3] sm:$0xff]
    %v643 = vld [vmem:[#allocation3 + $0x8] sm:$0xff]
    %v644 = vld [vmem:[#allocation3 + $0x10] sm:$0xff]
    %v645 = vld [vmem:[#allocation3 + $0x18] sm:$0xff]
    %v646 = vld [vmem:[#allocation3 + $0x20] sm:$0xff]
    %v647 = vld [vmem:[#allocation3 + $0x28] sm:$0xff]
    %v648 = vld [vmem:[#allocation3 + $0x30] sm:$0xff]
    %v649 = vld [vmem:[#allocation3 + $0x38] sm:$0xff]
    %v650 = vld [vmem:[#allocation3 + $0x40] sm:$0xff]
    %v651 = vld [vmem:[#allocation3 + $0x48] sm:$0xff]
    %v652 = vld [vmem:[#allocation3 + $0x50] sm:$0xff]
    %v653 = vld [vmem:[#allocation3 + $0x58] sm:$0xff]
    %v654 = vld [vmem:[#allocation3 + $0x60] sm:$0xff]
    %v655 = vld [vmem:[#allocation3 + $0x68] sm:$0xff]
    %v656 = vld [vmem:[#allocation3 + $0x70] sm:$0xff]
    %v657 = vld [vmem:[#allocation3 + $0x78] sm:$0xff]
    %v658 = vmul.f32 %v467, %v642
    %v659 = vmul.f32 %v469, %v643
    %v660 = vmul.f32 %v471, %v644
    %v661 = vmul.f32 %v473, %v645
    %v662 = vmul.f32 %v475, %v646
    %v663 = vmul.f32 %v477, %v647
    %v664 = vmul.f32 %v479, %v648
    %v665 = vmul.f32 %v481, %v649
    %v666 = vmul.f32 %v483, %v650
    %v667 = vmul.f32 %v485, %v651
    %v668 = vmul.f32 %v487, %v652
    %v669 = vmul.f32 %v489, %v653
    %v670 = vmul.f32 %v491, %v654
    %v671 = vmul.f32 %v493, %v655
    %v672 = vmul.f32 %v495, %v656
    %v673 = vmul.f32 %v497, %v657
    %674 = vadd.xlane.f32.xlu0 %v626
    %v675 = vpop.xlane.xlu0 %674
    %676 = vadd.xlane.f32.xlu0 %v627
    %v677 = vpop.xlane.xlu0 %676
    %678 = vadd.xlane.f32.xlu0 %v628
    %v679 = vpop.xlane.xlu0 %678
    %680 = vadd.xlane.f32.xlu0 %v629
    %v681 = vpop.xlane.xlu0 %680
    %682 = vadd.xlane.f32.xlu0 %v630
    %v683 = vpop.xlane.xlu0 %682
    %684 = vadd.xlane.f32.xlu0 %v631
    %v685 = vpop.xlane.xlu0 %684
    %686 = vadd.xlane.f32.xlu0 %v632
    %v687 = vpop.xlane.xlu0 %686
    %688 = vadd.xlane.f32.xlu0 %v633
    %v689 = vpop.xlane.xlu0 %688
    %690 = vadd.xlane.f32.xlu0 %v634
    %v691 = vpop.xlane.xlu0 %690
    %692 = vadd.xlane.f32.xlu0 %v635
    %v693 = vpop.xlane.xlu0 %692
    %694 = vadd.xlane.f32.xlu0 %v636
    %v695 = vpop.xlane.xlu0 %694
    %696 = vadd.xlane.f32.xlu0 %v637
    %v697 = vpop.xlane.xlu0 %696
    %698 = vadd.xlane.f32.xlu0 %v638
    %v699 = vpop.xlane.xlu0 %698
    %700 = vadd.xlane.f32.xlu0 %v639
    %v701 = vpop.xlane.xlu0 %700
    %702 = vadd.xlane.f32.xlu0 %v640
    %v703 = vpop.xlane.xlu0 %702
    %704 = vadd.xlane.f32.xlu0 %v641
    %v705 = vpop.xlane.xlu0 %704
    %v706 = vadd.f32 %v658, %v675
    %v707 = vadd.f32 %v659, %v677
    %v708 = vadd.f32 %v660, %v679
    %v709 = vadd.f32 %v661, %v681
    %v710 = vadd.f32 %v662, %v683
    %v711 = vadd.f32 %v663, %v685
    %v712 = vadd.f32 %v664, %v687
    %v713 = vadd.f32 %v665, %v689
    %v714 = vadd.f32 %v666, %v691
    %v715 = vadd.f32 %v667, %v693
    %v716 = vadd.f32 %v668, %v695
    %v717 = vadd.f32 %v669, %v697
    %v718 = vadd.f32 %v670, %v699
    %v719 = vadd.f32 %v671, %v701
    %v720 = vadd.f32 %v672, %v703
    %v721 = vadd.f32 %v673, %v705
    %vm722 = vcmask 7168
    %723 = vst.msk [vmem:[#allocation3] sm:$0xff] %vm722, %v706
    %724 = vst.msk [vmem:[#allocation3 + $0x8] sm:$0xff] %vm722, %v707
    %725 = vst.msk [vmem:[#allocation3 + $0x10] sm:$0xff] %vm722, %v708
    %726 = vst.msk [vmem:[#allocation3 + $0x18] sm:$0xff] %vm722, %v709
    %727 = vst.msk [vmem:[#allocation3 + $0x20] sm:$0xff] %vm722, %v710
    %728 = vst.msk [vmem:[#allocation3 + $0x28] sm:$0xff] %vm722, %v711
    %729 = vst.msk [vmem:[#allocation3 + $0x30] sm:$0xff] %vm722, %v712
    %730 = vst.msk [vmem:[#allocation3 + $0x38] sm:$0xff] %vm722, %v713
    %731 = vst.msk [vmem:[#allocation3 + $0x40] sm:$0xff] %vm722, %v714
    %732 = vst.msk [vmem:[#allocation3 + $0x48] sm:$0xff] %vm722, %v715
    %733 = vst.msk [vmem:[#allocation3 + $0x50] sm:$0xff] %vm722, %v716
    %734 = vst.msk [vmem:[#allocation3 + $0x58] sm:$0xff] %vm722, %v717
    %735 = vst.msk [vmem:[#allocation3 + $0x60] sm:$0xff] %vm722, %v718
    %736 = vst.msk [vmem:[#allocation3 + $0x68] sm:$0xff] %vm722, %v719
    %737 = vst.msk [vmem:[#allocation3 + $0x70] sm:$0xff] %vm722, %v720
    %738 = vst.msk [vmem:[#allocation3 + $0x78] sm:$0xff] %vm722, %v721
    %739 = vst.msk [vmem:[#allocation2] sm:$0xff] %vm722, %v434
    %740 = vst.msk [vmem:[#allocation2 + $0x8] sm:$0xff] %vm722, %v435
    %741 = vst.msk [vmem:[#allocation2 + $0x10] sm:$0xff] %vm722, %v436
    %742 = vst.msk [vmem:[#allocation2 + $0x18] sm:$0xff] %vm722, %v437
    %743 = vst.msk [vmem:[#allocation2 + $0x20] sm:$0xff] %vm722, %v438
    %744 = vst.msk [vmem:[#allocation2 + $0x28] sm:$0xff] %vm722, %v439
    %745 = vst.msk [vmem:[#allocation2 + $0x30] sm:$0xff] %vm722, %v440
    %746 = vst.msk [vmem:[#allocation2 + $0x38] sm:$0xff] %vm722, %v441
    %747 = vst.msk [vmem:[#allocation2 + $0x40] sm:$0xff] %vm722, %v442
    %748 = vst.msk [vmem:[#allocation2 + $0x48] sm:$0xff] %vm722, %v443
    %749 = vst.msk [vmem:[#allocation2 + $0x50] sm:$0xff] %vm722, %v444
    %750 = vst.msk [vmem:[#allocation2 + $0x58] sm:$0xff] %vm722, %v445
    %751 = vst.msk [vmem:[#allocation2 + $0x60] sm:$0xff] %vm722, %v446
    %752 = vst.msk [vmem:[#allocation2 + $0x68] sm:$0xff] %vm722, %v447
    %753 = vst.msk [vmem:[#allocation2 + $0x70] sm:$0xff] %vm722, %v448
    %754 = vst.msk [vmem:[#allocation2 + $0x78] sm:$0xff] %vm722, %v449
    %v755 = vld [vmem:[#allocation4] sm:$0xff]
    %v756 = vld [vmem:[#allocation4 + $0x8] sm:$0xff]
    %v757 = vld [vmem:[#allocation4 + $0x10] sm:$0xff]
    %v758 = vld [vmem:[#allocation4 + $0x18] sm:$0xff]
    %v759 = vld [vmem:[#allocation4 + $0x20] sm:$0xff]
    %v760 = vld [vmem:[#allocation4 + $0x28] sm:$0xff]
    %v761 = vld [vmem:[#allocation4 + $0x30] sm:$0xff]
    %v762 = vld [vmem:[#allocation4 + $0x38] sm:$0xff]
    %v763 = vld [vmem:[#allocation4 + $0x40] sm:$0xff]
    %v764 = vld [vmem:[#allocation4 + $0x48] sm:$0xff]
    %v765 = vld [vmem:[#allocation4 + $0x50] sm:$0xff]
    %v766 = vld [vmem:[#allocation4 + $0x58] sm:$0xff]
    %v767 = vld [vmem:[#allocation4 + $0x60] sm:$0xff]
    %v768 = vld [vmem:[#allocation4 + $0x68] sm:$0xff]
    %v769 = vld [vmem:[#allocation4 + $0x70] sm:$0xff]
    %v770 = vld [vmem:[#allocation4 + $0x78] sm:$0xff]
    %v771 = vsel %vm354, %v173, 0.0
    %v772 = vsel %vm355, %v174, 0.0
    %v773 = vsel %vm356, %v175, 0.0
    %v774 = vsel %vm357, %v176, 0.0
    %v775 = vsel %vm358, %v177, 0.0
    %v776 = vsel %vm359, %v178, 0.0
    %v777 = vsel %vm360, %v179, 0.0
    %v778 = vsel %vm361, %v180, 0.0
    %v779 = vsel %vm362, %v181, 0.0
    %v780 = vsel %vm363, %v182, 0.0
    %v781 = vsel %vm364, %v183, 0.0
    %v782 = vsel %vm365, %v184, 0.0
    %v783 = vsel %vm366, %v185, 0.0
    %v784 = vsel %vm367, %v186, 0.0
    %v785 = vsel %vm368, %v187, 0.0
    %v786 = vsel %vm369, %v188, 0.0
    %787 = vadd.xlane.f32.xlu0 %v771
    %v788 = vpop.xlane.xlu0 %787
    %789 = vadd.xlane.f32.xlu0 %v772
    %v790 = vpop.xlane.xlu0 %789
    %791 = vadd.xlane.f32.xlu0 %v773
    %v792 = vpop.xlane.xlu0 %791
    %793 = vadd.xlane.f32.xlu0 %v774
    %v794 = vpop.xlane.xlu0 %793
    %795 = vadd.xlane.f32.xlu0 %v775
    %v796 = vpop.xlane.xlu0 %795
    %797 = vadd.xlane.f32.xlu0 %v776
    %v798 = vpop.xlane.xlu0 %797
    %799 = vadd.xlane.f32.xlu0 %v777
    %v800 = vpop.xlane.xlu0 %799
    %801 = vadd.xlane.f32.xlu0 %v778
    %v802 = vpop.xlane.xlu0 %801
    %803 = vadd.xlane.f32.xlu0 %v779
    %v804 = vpop.xlane.xlu0 %803
    %805 = vadd.xlane.f32.xlu0 %v780
    %v806 = vpop.xlane.xlu0 %805
    %807 = vadd.xlane.f32.xlu0 %v781
    %v808 = vpop.xlane.xlu0 %807
    %809 = vadd.xlane.f32.xlu0 %v782
    %v810 = vpop.xlane.xlu0 %809
    %811 = vadd.xlane.f32.xlu0 %v783
    %v812 = vpop.xlane.xlu0 %811
    %813 = vadd.xlane.f32.xlu0 %v784
    %v814 = vpop.xlane.xlu0 %813
    %815 = vadd.xlane.f32.xlu0 %v785
    %v816 = vpop.xlane.xlu0 %815
    %817 = vadd.xlane.f32.xlu0 %v786
    %v818 = vpop.xlane.xlu0 %817
    %v819 = vadd.f32 %v755, %v788
    %v820 = vadd.f32 %v756, %v790
    %v821 = vadd.f32 %v757, %v792
    %v822 = vadd.f32 %v758, %v794
    %v823 = vadd.f32 %v759, %v796
    %v824 = vadd.f32 %v760, %v798
    %v825 = vadd.f32 %v761, %v800
    %v826 = vadd.f32 %v762, %v802
    %v827 = vadd.f32 %v763, %v804
    %v828 = vadd.f32 %v764, %v806
    %v829 = vadd.f32 %v765, %v808
    %v830 = vadd.f32 %v766, %v810
    %v831 = vadd.f32 %v767, %v812
    %v832 = vadd.f32 %v768, %v814
    %v833 = vadd.f32 %v769, %v816
    %v834 = vadd.f32 %v770, %v818
    %835 = vst.msk [vmem:[#allocation4] sm:$0xff] %vm722, %v819
    %836 = vst.msk [vmem:[#allocation4 + $0x8] sm:$0xff] %vm722, %v820
    %837 = vst.msk [vmem:[#allocation4 + $0x10] sm:$0xff] %vm722, %v821
    %838 = vst.msk [vmem:[#allocation4 + $0x18] sm:$0xff] %vm722, %v822
    %839 = vst.msk [vmem:[#allocation4 + $0x20] sm:$0xff] %vm722, %v823
    %840 = vst.msk [vmem:[#allocation4 + $0x28] sm:$0xff] %vm722, %v824
    %841 = vst.msk [vmem:[#allocation4 + $0x30] sm:$0xff] %vm722, %v825
    %842 = vst.msk [vmem:[#allocation4 + $0x38] sm:$0xff] %vm722, %v826
    %843 = vst.msk [vmem:[#allocation4 + $0x40] sm:$0xff] %vm722, %v827
    %844 = vst.msk [vmem:[#allocation4 + $0x48] sm:$0xff] %vm722, %v828
    %845 = vst.msk [vmem:[#allocation4 + $0x50] sm:$0xff] %vm722, %v829
    %846 = vst.msk [vmem:[#allocation4 + $0x58] sm:$0xff] %vm722, %v830
    %847 = vst.msk [vmem:[#allocation4 + $0x60] sm:$0xff] %vm722, %v831
    %848 = vst.msk [vmem:[#allocation4 + $0x68] sm:$0xff] %vm722, %v832
    %849 = vst.msk [vmem:[#allocation4 + $0x70] sm:$0xff] %vm722, %v833
    %850 = vst.msk [vmem:[#allocation4 + $0x78] sm:$0xff] %vm722, %v834
  $region33: #{tpu_custom_call.1} parent=0 // pred_fallthru
    _
  %p851 = pneg %p276
  // Predicated region
  $region34: #{tpu_custom_call.1} parent=0 // pred_check
    _
  $region35: #{tpu_custom_call.1} parent=0 // pred_check_branch
    %853 = sbr.rel (%p276) target = $region37
  $region36: #{tpu_custom_call.1} parent=0 // pred_region
    %854 = vmax.xlane.f32.xlu0 %v173
    %v855 = vpop.xlane.xlu0 %854
    %856 = vmax.xlane.f32.xlu0 %v174
    %v857 = vpop.xlane.xlu0 %856
    %858 = vmax.xlane.f32.xlu0 %v175
    %v859 = vpop.xlane.xlu0 %858
    %860 = vmax.xlane.f32.xlu0 %v176
    %v861 = vpop.xlane.xlu0 %860
    %862 = vmax.xlane.f32.xlu0 %v177
    %v863 = vpop.xlane.xlu0 %862
    %864 = vmax.xlane.f32.xlu0 %v178
    %v865 = vpop.xlane.xlu0 %864
    %866 = vmax.xlane.f32.xlu0 %v179
    %v867 = vpop.xlane.xlu0 %866
    %868 = vmax.xlane.f32.xlu0 %v180
    %v869 = vpop.xlane.xlu0 %868
    %870 = vmax.xlane.f32.xlu0 %v181
    %v871 = vpop.xlane.xlu0 %870
    %872 = vmax.xlane.f32.xlu0 %v182
    %v873 = vpop.xlane.xlu0 %872
    %874 = vmax.xlane.f32.xlu0 %v183
    %v875 = vpop.xlane.xlu0 %874
    %876 = vmax.xlane.f32.xlu0 %v184
    %v877 = vpop.xlane.xlu0 %876
    %878 = vmax.xlane.f32.xlu0 %v185
    %v879 = vpop.xlane.xlu0 %878
    %880 = vmax.xlane.f32.xlu0 %v186
    %v881 = vpop.xlane.xlu0 %880
    %882 = vmax.xlane.f32.xlu0 %v187
    %v883 = vpop.xlane.xlu0 %882
    %884 = vmax.xlane.f32.xlu0 %v188
    %v885 = vpop.xlane.xlu0 %884
    %v886 = vld [vmem:[#allocation2] sm:$0xff]
    %v887 = vld [vmem:[#allocation2 + $0x8] sm:$0xff]
    %v888 = vld [vmem:[#allocation2 + $0x10] sm:$0xff]
    %v889 = vld [vmem:[#allocation2 + $0x18] sm:$0xff]
    %v890 = vld [vmem:[#allocation2 + $0x20] sm:$0xff]
    %v891 = vld [vmem:[#allocation2 + $0x28] sm:$0xff]
    %v892 = vld [vmem:[#allocation2 + $0x30] sm:$0xff]
    %v893 = vld [vmem:[#allocation2 + $0x38] sm:$0xff]
    %v894 = vld [vmem:[#allocation2 + $0x40] sm:$0xff]
    %v895 = vld [vmem:[#allocation2 + $0x48] sm:$0xff]
    %v896 = vld [vmem:[#allocation2 + $0x50] sm:$0xff]
    %v897 = vld [vmem:[#allocation2 + $0x58] sm:$0xff]
    %v898 = vld [vmem:[#allocation2 + $0x60] sm:$0xff]
    %v899 = vld [vmem:[#allocation2 + $0x68] sm:$0xff]
    %v900 = vld [vmem:[#allocation2 + $0x70] sm:$0xff]
    %v901 = vld [vmem:[#allocation2 + $0x78] sm:$0xff]
    %v902 = vmax.f32 %v886, %v855
    %v903 = vmax.f32 %v887, %v857
    %v904 = vmax.f32 %v888, %v859
    %v905 = vmax.f32 %v889, %v861
    %v906 = vmax.f32 %v890, %v863
    %v907 = vmax.f32 %v891, %v865
    %v908 = vmax.f32 %v892, %v867
    %v909 = vmax.f32 %v893, %v869
    %v910 = vmax.f32 %v894, %v871
    %v911 = vmax.f32 %v895, %v873
    %v912 = vmax.f32 %v896, %v875
    %v913 = vmax.f32 %v897, %v877
    %v914 = vmax.f32 %v898, %v879
    %v915 = vmax.f32 %v899, %v881
    %v916 = vmax.f32 %v900, %v883
    %v917 = vmax.f32 %v901, %v885
    %v918 = vsub.f32 %v886, %v902
    %v919 = vsub.f32 %v887, %v903
    %v920 = vsub.f32 %v888, %v904
    %v921 = vsub.f32 %v889, %v905
    %v922 = vsub.f32 %v890, %v906
    %v923 = vsub.f32 %v891, %v907
    %v924 = vsub.f32 %v892, %v908
    %v925 = vsub.f32 %v893, %v909
    %v926 = vsub.f32 %v894, %v910
    %v927 = vsub.f32 %v895, %v911
    %v928 = vsub.f32 %v896, %v912
    %v929 = vsub.f32 %v897, %v913
    %v930 = vsub.f32 %v898, %v914
    %v931 = vsub.f32 %v899, %v915
    %v932 = vsub.f32 %v900, %v916
    %v933 = vsub.f32 %v901, %v917
    %v934 = vmul.f32 %v918, 1.442695
    %v935 = vpow.pop %v934
    %v936 = vmul.f32 %v919, 1.442695
    %v937 = vpow.pop %v936
    %v938 = vmul.f32 %v920, 1.442695
    %v939 = vpow.pop %v938
    %v940 = vmul.f32 %v921, 1.442695
    %v941 = vpow.pop %v940
    %v942 = vmul.f32 %v922, 1.442695
    %v943 = vpow.pop %v942
    %v944 = vmul.f32 %v923, 1.442695
    %v945 = vpow.pop %v944
    %v946 = vmul.f32 %v924, 1.442695
    %v947 = vpow.pop %v946
    %v948 = vmul.f32 %v925, 1.442695
    %v949 = vpow.pop %v948
    %v950 = vmul.f32 %v926, 1.442695
    %v951 = vpow.pop %v950
    %v952 = vmul.f32 %v927, 1.442695
    %v953 = vpow.pop %v952
    %v954 = vmul.f32 %v928, 1.442695
    %v955 = vpow.pop %v954
    %v956 = vmul.f32 %v929, 1.442695
    %v957 = vpow.pop %v956
    %v958 = vmul.f32 %v930, 1.442695
    %v959 = vpow.pop %v958
    %v960 = vmul.f32 %v931, 1.442695
    %v961 = vpow.pop %v960
    %v962 = vmul.f32 %v932, 1.442695
    %v963 = vpow.pop %v962
    %v964 = vmul.f32 %v933, 1.442695
    %v965 = vpow.pop %v964
    %967 = vset.pattern.permute.xlu0 0
    %968 = vperm.xlu0 %967, %v902
    %v969 = vpop.permute.xlu0 %968
    %972 = vset.pattern.permute.xlu0 0
    %973 = vperm.xlu0 %972, %v903
    %v974 = vpop.permute.xlu0 %973
    %977 = vset.pattern.permute.xlu0 0
    %978 = vperm.xlu0 %977, %v904
    %v979 = vpop.permute.xlu0 %978
    %982 = vset.pattern.permute.xlu0 0
    %983 = vperm.xlu0 %982, %v905
    %v984 = vpop.permute.xlu0 %983
    %987 = vset.pattern.permute.xlu0 0
    %988 = vperm.xlu0 %987, %v906
    %v989 = vpop.permute.xlu0 %988
    %992 = vset.pattern.permute.xlu0 0
    %993 = vperm.xlu0 %992, %v907
    %v994 = vpop.permute.xlu0 %993
    %997 = vset.pattern.permute.xlu0 0
    %998 = vperm.xlu0 %997, %v908
    %v999 = vpop.permute.xlu0 %998
    %1002 = vset.pattern.permute.xlu0 0
    %1003 = vperm.xlu0 %1002, %v909
    %v1004 = vpop.permute.xlu0 %1003
    %1007 = vset.pattern.permute.xlu0 0
    %1008 = vperm.xlu0 %1007, %v910
    %v1009 = vpop.permute.xlu0 %1008
    %1012 = vset.pattern.permute.xlu0 0
    %1013 = vperm.xlu0 %1012, %v911
    %v1014 = vpop.permute.xlu0 %1013
    %1017 = vset.pattern.permute.xlu0 0
    %1018 = vperm.xlu0 %1017, %v912
    %v1019 = vpop.permute.xlu0 %1018
    %1022 = vset.pattern.permute.xlu0 0
    %1023 = vperm.xlu0 %1022, %v913
    %v1024 = vpop.permute.xlu0 %1023
    %1027 = vset.pattern.permute.xlu0 0
    %1028 = vperm.xlu0 %1027, %v914
    %v1029 = vpop.permute.xlu0 %1028
    %1032 = vset.pattern.permute.xlu0 0
    %1033 = vperm.xlu0 %1032, %v915
    %v1034 = vpop.permute.xlu0 %1033
    %1037 = vset.pattern.permute.xlu0 0
    %1038 = vperm.xlu0 %1037, %v916
    %v1039 = vpop.permute.xlu0 %1038
    %1042 = vset.pattern.permute.xlu0 0
    %1043 = vperm.xlu0 %1042, %v917
    %v1044 = vpop.permute.xlu0 %1043
    %v1046 = vsub.f32 %v173, %v969
    %v1047 = vsub.f32 %v174, %v974
    %v1048 = vsub.f32 %v175, %v979
    %v1049 = vsub.f32 %v176, %v984
    %v1050 = vsub.f32 %v177, %v989
    %v1051 = vsub.f32 %v178, %v994
    %v1052 = vsub.f32 %v179, %v999
    %v1053 = vsub.f32 %v180, %v1004
    %v1054 = vsub.f32 %v181, %v1009
    %v1055 = vsub.f32 %v182, %v1014
    %v1056 = vsub.f32 %v183, %v1019
    %v1057 = vsub.f32 %v184, %v1024
    %v1058 = vsub.f32 %v185, %v1029
    %v1059 = vsub.f32 %v186, %v1034
    %v1060 = vsub.f32 %v187, %v1039
    %v1061 = vsub.f32 %v188, %v1044
    %v1062 = vmul.f32 %v1046, 1.442695
    %v1063 = vpow.pop %v1062
    %v1064 = vmul.f32 %v1047, 1.442695
    %v1065 = vpow.pop %v1064
    %v1066 = vmul.f32 %v1048, 1.442695
    %v1067 = vpow.pop %v1066
    %v1068 = vmul.f32 %v1049, 1.442695
    %v1069 = vpow.pop %v1068
    %v1070 = vmul.f32 %v1050, 1.442695
    %v1071 = vpow.pop %v1070
    %v1072 = vmul.f32 %v1051, 1.442695
    %v1073 = vpow.pop %v1072
    %v1074 = vmul.f32 %v1052, 1.442695
    %v1075 = vpow.pop %v1074
    %v1076 = vmul.f32 %v1053, 1.442695
    %v1077 = vpow.pop %v1076
    %v1078 = vmul.f32 %v1054, 1.442695
    %v1079 = vpow.pop %v1078
    %v1080 = vmul.f32 %v1055, 1.442695
    %v1081 = vpow.pop %v1080
    %v1082 = vmul.f32 %v1056, 1.442695
    %v1083 = vpow.pop %v1082
    %v1084 = vmul.f32 %v1057, 1.442695
    %v1085 = vpow.pop %v1084
    %v1086 = vmul.f32 %v1058, 1.442695
    %v1087 = vpow.pop %v1086
    %v1088 = vmul.f32 %v1059, 1.442695
    %v1089 = vpow.pop %v1088
    %v1090 = vmul.f32 %v1060, 1.442695
    %v1091 = vpow.pop %v1090
    %v1092 = vmul.f32 %v1061, 1.442695
    %v1093 = vpow.pop %v1092
    %v1094 = vld [vmem:[#allocation3] sm:$0xff]
    %v1095 = vld [vmem:[#allocation3 + $0x8] sm:$0xff]
    %v1096 = vld [vmem:[#allocation3 + $0x10] sm:$0xff]
    %v1097 = vld [vmem:[#allocation3 + $0x18] sm:$0xff]
    %v1098 = vld [vmem:[#allocation3 + $0x20] sm:$0xff]
    %v1099 = vld [vmem:[#allocation3 + $0x28] sm:$0xff]
    %v1100 = vld [vmem:[#allocation3 + $0x30] sm:$0xff]
    %v1101 = vld [vmem:[#allocation3 + $0x38] sm:$0xff]
    %v1102 = vld [vmem:[#allocation3 + $0x40] sm:$0xff]
    %v1103 = vld [vmem:[#allocation3 + $0x48] sm:$0xff]
    %v1104 = vld [vmem:[#allocation3 + $0x50] sm:$0xff]
    %v1105 = vld [vmem:[#allocation3 + $0x58] sm:$0xff]
    %v1106 = vld [vmem:[#allocation3 + $0x60] sm:$0xff]
    %v1107 = vld [vmem:[#allocation3 + $0x68] sm:$0xff]
    %v1108 = vld [vmem:[#allocation3 + $0x70] sm:$0xff]
    %v1109 = vld [vmem:[#allocation3 + $0x78] sm:$0xff]
    %v1110 = vmul.f32 %v935, %v1094
    %v1111 = vmul.f32 %v937, %v1095
    %v1112 = vmul.f32 %v939, %v1096
    %v1113 = vmul.f32 %v941, %v1097
    %v1114 = vmul.f32 %v943, %v1098
    %v1115 = vmul.f32 %v945, %v1099
    %v1116 = vmul.f32 %v947, %v1100
    %v1117 = vmul.f32 %v949, %v1101
    %v1118 = vmul.f32 %v951, %v1102
    %v1119 = vmul.f32 %v953, %v1103
    %v1120 = vmul.f32 %v955, %v1104
    %v1121 = vmul.f32 %v957, %v1105
    %v1122 = vmul.f32 %v959, %v1106
    %v1123 = vmul.f32 %v961, %v1107
    %v1124 = vmul.f32 %v963, %v1108
    %v1125 = vmul.f32 %v965, %v1109
    %1126 = vadd.xlane.f32.xlu0 %v1063
    %v1127 = vpop.xlane.xlu0 %1126
    %1128 = vadd.xlane.f32.xlu0 %v1065
    %v1129 = vpop.xlane.xlu0 %1128
    %1130 = vadd.xlane.f32.xlu0 %v1067
    %v1131 = vpop.xlane.xlu0 %1130
    %1132 = vadd.xlane.f32.xlu0 %v1069
    %v1133 = vpop.xlane.xlu0 %1132
    %1134 = vadd.xlane.f32.xlu0 %v1071
    %v1135 = vpop.xlane.xlu0 %1134
    %1136 = vadd.xlane.f32.xlu0 %v1073
    %v1137 = vpop.xlane.xlu0 %1136
    %1138 = vadd.xlane.f32.xlu0 %v1075
    %v1139 = vpop.xlane.xlu0 %1138
    %1140 = vadd.xlane.f32.xlu0 %v1077
    %v1141 = vpop.xlane.xlu0 %1140
    %1142 = vadd.xlane.f32.xlu0 %v1079
    %v1143 = vpop.xlane.xlu0 %1142
    %1144 = vadd.xlane.f32.xlu0 %v1081
    %v1145 = vpop.xlane.xlu0 %1144
    %1146 = vadd.xlane.f32.xlu0 %v1083
    %v1147 = vpop.xlane.xlu0 %1146
    %1148 = vadd.xlane.f32.xlu0 %v1085
    %v1149 = vpop.xlane.xlu0 %1148
    %1150 = vadd.xlane.f32.xlu0 %v1087
    %v1151 = vpop.xlane.xlu0 %1150
    %1152 = vadd.xlane.f32.xlu0 %v1089
    %v1153 = vpop.xlane.xlu0 %1152
    %1154 = vadd.xlane.f32.xlu0 %v1091
    %v1155 = vpop.xlane.xlu0 %1154
    %1156 = vadd.xlane.f32.xlu0 %v1093
    %v1157 = vpop.xlane.xlu0 %1156
    %v1158 = vadd.f32 %v1110, %v1127
    %v1159 = vadd.f32 %v1111, %v1129
    %v1160 = vadd.f32 %v1112, %v1131
    %v1161 = vadd.f32 %v1113, %v1133
    %v1162 = vadd.f32 %v1114, %v1135
    %v1163 = vadd.f32 %v1115, %v1137
    %v1164 = vadd.f32 %v1116, %v1139
    %v1165 = vadd.f32 %v1117, %v1141
    %v1166 = vadd.f32 %v1118, %v1143
    %v1167 = vadd.f32 %v1119, %v1145
    %v1168 = vadd.f32 %v1120, %v1147
    %v1169 = vadd.f32 %v1121, %v1149
    %v1170 = vadd.f32 %v1122, %v1151
    %v1171 = vadd.f32 %v1123, %v1153
    %v1172 = vadd.f32 %v1124, %v1155
    %v1173 = vadd.f32 %v1125, %v1157
    %vm1174 = vcmask 7168
    %1175 = vst.msk [vmem:[#allocation3] sm:$0xff] %vm1174, %v1158
    %1176 = vst.msk [vmem:[#allocation3 + $0x8] sm:$0xff] %vm1174, %v1159
    %1177 = vst.msk [vmem:[#allocation3 + $0x10] sm:$0xff] %vm1174, %v1160
    %1178 = vst.msk [vmem:[#allocation3 + $0x18] sm:$0xff] %vm1174, %v1161
    %1179 = vst.msk [vmem:[#allocation3 + $0x20] sm:$0xff] %vm1174, %v1162
    %1180 = vst.msk [vmem:[#allocation3 + $0x28] sm:$0xff] %vm1174, %v1163
    %1181 = vst.msk [vmem:[#allocation3 + $0x30] sm:$0xff] %vm1174, %v1164
    %1182 = vst.msk [vmem:[#allocation3 + $0x38] sm:$0xff] %vm1174, %v1165
    %1183 = vst.msk [vmem:[#allocation3 + $0x40] sm:$0xff] %vm1174, %v1166
    %1184 = vst.msk [vmem:[#allocation3 + $0x48] sm:$0xff] %vm1174, %v1167
    %1185 = vst.msk [vmem:[#allocation3 + $0x50] sm:$0xff] %vm1174, %v1168
    %1186 = vst.msk [vmem:[#allocation3 + $0x58] sm:$0xff] %vm1174, %v1169
    %1187 = vst.msk [vmem:[#allocation3 + $0x60] sm:$0xff] %vm1174, %v1170
    %1188 = vst.msk [vmem:[#allocation3 + $0x68] sm:$0xff] %vm1174, %v1171
    %1189 = vst.msk [vmem:[#allocation3 + $0x70] sm:$0xff] %vm1174, %v1172
    %1190 = vst.msk [vmem:[#allocation3 + $0x78] sm:$0xff] %vm1174, %v1173
    %1191 = vst.msk [vmem:[#allocation2] sm:$0xff] %vm1174, %v902
    %1192 = vst.msk [vmem:[#allocation2 + $0x8] sm:$0xff] %vm1174, %v903
    %1193 = vst.msk [vmem:[#allocation2 + $0x10] sm:$0xff] %vm1174, %v904
    %1194 = vst.msk [vmem:[#allocation2 + $0x18] sm:$0xff] %vm1174, %v905
    %1195 = vst.msk [vmem:[#allocation2 + $0x20] sm:$0xff] %vm1174, %v906
    %1196 = vst.msk [vmem:[#allocation2 + $0x28] sm:$0xff] %vm1174, %v907
    %1197 = vst.msk [vmem:[#allocation2 + $0x30] sm:$0xff] %vm1174, %v908
    %1198 = vst.msk [vmem:[#allocation2 + $0x38] sm:$0xff] %vm1174, %v909
    %1199 = vst.msk [vmem:[#allocation2 + $0x40] sm:$0xff] %vm1174, %v910
    %1200 = vst.msk [vmem:[#allocation2 + $0x48] sm:$0xff] %vm1174, %v911
    %1201 = vst.msk [vmem:[#allocation2 + $0x50] sm:$0xff] %vm1174, %v912
    %1202 = vst.msk [vmem:[#allocation2 + $0x58] sm:$0xff] %vm1174, %v913
    %1203 = vst.msk [vmem:[#allocation2 + $0x60] sm:$0xff] %vm1174, %v914
    %1204 = vst.msk [vmem:[#allocation2 + $0x68] sm:$0xff] %vm1174, %v915
    %1205 = vst.msk [vmem:[#allocation2 + $0x70] sm:$0xff] %vm1174, %v916
    %1206 = vst.msk [vmem:[#allocation2 + $0x78] sm:$0xff] %vm1174, %v917
    %v1207 = vld [vmem:[#allocation4] sm:$0xff]
    %v1208 = vld [vmem:[#allocation4 + $0x8] sm:$0xff]
    %v1209 = vld [vmem:[#allocation4 + $0x10] sm:$0xff]
    %v1210 = vld [vmem:[#allocation4 + $0x18] sm:$0xff]
    %v1211 = vld [vmem:[#allocation4 + $0x20] sm:$0xff]
    %v1212 = vld [vmem:[#allocation4 + $0x28] sm:$0xff]
    %v1213 = vld [vmem:[#allocation4 + $0x30] sm:$0xff]
    %v1214 = vld [vmem:[#allocation4 + $0x38] sm:$0xff]
    %v1215 = vld [vmem:[#allocation4 + $0x40] sm:$0xff]
    %v1216 = vld [vmem:[#allocation4 + $0x48] sm:$0xff]
    %v1217 = vld [vmem:[#allocation4 + $0x50] sm:$0xff]
    %v1218 = vld [vmem:[#allocation4 + $0x58] sm:$0xff]
    %v1219 = vld [vmem:[#allocation4 + $0x60] sm:$0xff]
    %v1220 = vld [vmem:[#allocation4 + $0x68] sm:$0xff]
    %v1221 = vld [vmem:[#allocation4 + $0x70] sm:$0xff]
    %v1222 = vld [vmem:[#allocation4 + $0x78] sm:$0xff]
    %v1223 = vsel %vm259, %v173, 0.0
    %v1224 = vsel %vm260, %v174, 0.0
    %v1225 = vsel %vm261, %v175, 0.0
    %v1226 = vsel %vm262, %v176, 0.0
    %v1227 = vsel %vm263, %v177, 0.0
    %v1228 = vsel %vm264, %v178, 0.0
    %v1229 = vsel %vm265, %v179, 0.0
    %v1230 = vsel %vm266, %v180, 0.0
    %v1231 = vsel %vm267, %v181, 0.0
    %v1232 = vsel %vm268, %v182, 0.0
    %v1233 = vsel %vm269, %v183, 0.0
    %v1234 = vsel %vm270, %v184, 0.0
    %v1235 = vsel %vm271, %v185, 0.0
    %v1236 = vsel %vm272, %v186, 0.0
    %v1237 = vsel %vm273, %v187, 0.0
    %v1238 = vsel %vm274, %v188, 0.0
    %1239 = vadd.xlane.f32.xlu0 %v1223
    %v1240 = vpop.xlane.xlu0 %1239
    %1241 = vadd.xlane.f32.xlu0 %v1224
    %v1242 = vpop.xlane.xlu0 %1241
    %1243 = vadd.xlane.f32.xlu0 %v1225
    %v1244 = vpop.xlane.xlu0 %1243
    %1245 = vadd.xlane.f32.xlu0 %v1226
    %v1246 = vpop.xlane.xlu0 %1245
    %1247 = vadd.xlane.f32.xlu0 %v1227
    %v1248 = vpop.xlane.xlu0 %1247
    %1249 = vadd.xlane.f32.xlu0 %v1228
    %v1250 = vpop.xlane.xlu0 %1249
    %1251 = vadd.xlane.f32.xlu0 %v1229
    %v1252 = vpop.xlane.xlu0 %1251
    %1253 = vadd.xlane.f32.xlu0 %v1230
    %v1254 = vpop.xlane.xlu0 %1253
    %1255 = vadd.xlane.f32.xlu0 %v1231
    %v1256 = vpop.xlane.xlu0 %1255
    %1257 = vadd.xlane.f32.xlu0 %v1232
    %v1258 = vpop.xlane.xlu0 %1257
    %1259 = vadd.xlane.f32.xlu0 %v1233
    %v1260 = vpop.xlane.xlu0 %1259
    %1261 = vadd.xlane.f32.xlu0 %v1234
    %v1262 = vpop.xlane.xlu0 %1261
    %1263 = vadd.xlane.f32.xlu0 %v1235
    %v1264 = vpop.xlane.xlu0 %1263
    %1265 = vadd.xlane.f32.xlu0 %v1236
    %v1266 = vpop.xlane.xlu0 %1265
    %1267 = vadd.xlane.f32.xlu0 %v1237
    %v1268 = vpop.xlane.xlu0 %1267
    %1269 = vadd.xlane.f32.xlu0 %v1238
    %v1270 = vpop.xlane.xlu0 %1269
    %v1271 = vadd.f32 %v1207, %v1240
    %v1272 = vadd.f32 %v1208, %v1242
    %v1273 = vadd.f32 %v1209, %v1244
    %v1274 = vadd.f32 %v1210, %v1246
    %v1275 = vadd.f32 %v1211, %v1248
    %v1276 = vadd.f32 %v1212, %v1250
    %v1277 = vadd.f32 %v1213, %v1252
    %v1278 = vadd.f32 %v1214, %v1254
    %v1279 = vadd.f32 %v1215, %v1256
    %v1280 = vadd.f32 %v1216, %v1258
    %v1281 = vadd.f32 %v1217, %v1260
    %v1282 = vadd.f32 %v1218, %v1262
    %v1283 = vadd.f32 %v1219, %v1264
    %v1284 = vadd.f32 %v1220, %v1266
    %v1285 = vadd.f32 %v1221, %v1268
    %v1286 = vadd.f32 %v1222, %v1270
    %1287 = vst.msk [vmem:[#allocation4] sm:$0xff] %vm1174, %v1271
    %1288 = vst.msk [vmem:[#allocation4 + $0x8] sm:$0xff] %vm1174, %v1272
    %1289 = vst.msk [vmem:[#allocation4 + $0x10] sm:$0xff] %vm1174, %v1273
    %1290 = vst.msk [vmem:[#allocation4 + $0x18] sm:$0xff] %vm1174, %v1274
    %1291 = vst.msk [vmem:[#allocation4 + $0x20] sm:$0xff] %vm1174, %v1275
    %1292 = vst.msk [vmem:[#allocation4 + $0x28] sm:$0xff] %vm1174, %v1276
    %1293 = vst.msk [vmem:[#allocation4 + $0x30] sm:$0xff] %vm1174, %v1277
    %1294 = vst.msk [vmem:[#allocation4 + $0x38] sm:$0xff] %vm1174, %v1278
    %1295 = vst.msk [vmem:[#allocation4 + $0x40] sm:$0xff] %vm1174, %v1279
    %1296 = vst.msk [vmem:[#allocation4 + $0x48] sm:$0xff] %vm1174, %v1280
    %1297 = vst.msk [vmem:[#allocation4 + $0x50] sm:$0xff] %vm1174, %v1281
    %1298 = vst.msk [vmem:[#allocation4 + $0x58] sm:$0xff] %vm1174, %v1282
    %1299 = vst.msk [vmem:[#allocation4 + $0x60] sm:$0xff] %vm1174, %v1283
    %1300 = vst.msk [vmem:[#allocation4 + $0x68] sm:$0xff] %vm1174, %v1284
    %1301 = vst.msk [vmem:[#allocation4 + $0x70] sm:$0xff] %vm1174, %v1285
    %1302 = vst.msk [vmem:[#allocation4 + $0x78] sm:$0xff] %vm1174, %v1286
  $region37: #{tpu_custom_call.1} parent=0 // pred_fallthru
    _
  // Predicated region
  $region38: #{tpu_custom_call.1} parent=0 // pred_check
    %p1303 = pneg %p23
  $region39: #{tpu_custom_call.1} parent=0 // pred_check_branch
    %1305 = sbr.rel (%p1303) target = $region41
  $region40: #{tpu_custom_call.1} parent=0 // pred_region
    %v1306 = vld [vmem:[#allocation2] sm:$0xff]
    %v1307 = vld [vmem:[#allocation2 + $0x8] sm:$0xff]
    %v1308 = vld [vmem:[#allocation2 + $0x10] sm:$0xff]
    %v1309 = vld [vmem:[#allocation2 + $0x18] sm:$0xff]
    %v1310 = vld [vmem:[#allocation2 + $0x20] sm:$0xff]
    %v1311 = vld [vmem:[#allocation2 + $0x28] sm:$0xff]
    %v1312 = vld [vmem:[#allocation2 + $0x30] sm:$0xff]
    %v1313 = vld [vmem:[#allocation2 + $0x38] sm:$0xff]
    %v1314 = vld [vmem:[#allocation2 + $0x40] sm:$0xff]
    %v1315 = vld [vmem:[#allocation2 + $0x48] sm:$0xff]
    %v1316 = vld [vmem:[#allocation2 + $0x50] sm:$0xff]
    %v1317 = vld [vmem:[#allocation2 + $0x58] sm:$0xff]
    %v1318 = vld [vmem:[#allocation2 + $0x60] sm:$0xff]
    %v1319 = vld [vmem:[#allocation2 + $0x68] sm:$0xff]
    %v1320 = vld [vmem:[#allocation2 + $0x70] sm:$0xff]
    %v1321 = vld [vmem:[#allocation2 + $0x78] sm:$0xff]
    %v1322 = vld [vmem:[#allocation3] sm:$0xff]
    %v1323 = vld [vmem:[#allocation3 + $0x8] sm:$0xff]
    %v1324 = vld [vmem:[#allocation3 + $0x10] sm:$0xff]
    %v1325 = vld [vmem:[#allocation3 + $0x18] sm:$0xff]
    %v1326 = vld [vmem:[#allocation3 + $0x20] sm:$0xff]
    %v1327 = vld [vmem:[#allocation3 + $0x28] sm:$0xff]
    %v1328 = vld [vmem:[#allocation3 + $0x30] sm:$0xff]
    %v1329 = vld [vmem:[#allocation3 + $0x38] sm:$0xff]
    %v1330 = vld [vmem:[#allocation3 + $0x40] sm:$0xff]
    %v1331 = vld [vmem:[#allocation3 + $0x48] sm:$0xff]
    %v1332 = vld [vmem:[#allocation3 + $0x50] sm:$0xff]
    %v1333 = vld [vmem:[#allocation3 + $0x58] sm:$0xff]
    %v1334 = vld [vmem:[#allocation3 + $0x60] sm:$0xff]
    %v1335 = vld [vmem:[#allocation3 + $0x68] sm:$0xff]
    %v1336 = vld [vmem:[#allocation3 + $0x70] sm:$0xff]
    %v1337 = vld [vmem:[#allocation3 + $0x78] sm:$0xff]
    %v1338 = vlog2.pop %v1322
    %v1339 = vmul.f32 %v1338, 0.6931472
    %v1340 = vlog2.pop %v1323
    %v1341 = vmul.f32 %v1340, 0.6931472
    %v1342 = vlog2.pop %v1324
    %v1343 = vmul.f32 %v1342, 0.6931472
    %v1344 = vlog2.pop %v1325
    %v1345 = vmul.f32 %v1344, 0.6931472
    %v1346 = vlog2.pop %v1326
    %v1347 = vmul.f32 %v1346, 0.6931472
    %v1348 = vlog2.pop %v1327
    %v1349 = vmul.f32 %v1348, 0.6931472
    %v1350 = vlog2.pop %v1328
    %v1351 = vmul.f32 %v1350, 0.6931472
    %v1352 = vlog2.pop %v1329
    %v1353 = vmul.f32 %v1352, 0.6931472
    %v1354 = vlog2.pop %v1330
    %v1355 = vmul.f32 %v1354, 0.6931472
    %v1356 = vlog2.pop %v1331
    %v1357 = vmul.f32 %v1356, 0.6931472
    %v1358 = vlog2.pop %v1332
    %v1359 = vmul.f32 %v1358, 0.6931472
    %v1360 = vlog2.pop %v1333
    %v1361 = vmul.f32 %v1360, 0.6931472
    %v1362 = vlog2.pop %v1334
    %v1363 = vmul.f32 %v1362, 0.6931472
    %v1364 = vlog2.pop %v1335
    %v1365 = vmul.f32 %v1364, 0.6931472
    %v1366 = vlog2.pop %v1336
    %v1367 = vmul.f32 %v1366, 0.6931472
    %v1368 = vlog2.pop %v1337
    %v1369 = vmul.f32 %v1368, 0.6931472
    %v1370 = vadd.f32 %v1306, %v1339
    %v1371 = vadd.f32 %v1307, %v1341
    %v1372 = vadd.f32 %v1308, %v1343
    %v1373 = vadd.f32 %v1309, %v1345
    %v1374 = vadd.f32 %v1310, %v1347
    %v1375 = vadd.f32 %v1311, %v1349
    %v1376 = vadd.f32 %v1312, %v1351
    %v1377 = vadd.f32 %v1313, %v1353
    %v1378 = vadd.f32 %v1314, %v1355
    %v1379 = vadd.f32 %v1315, %v1357
    %v1380 = vadd.f32 %v1316, %v1359
    %v1381 = vadd.f32 %v1317, %v1361
    %v1382 = vadd.f32 %v1318, %v1363
    %v1383 = vadd.f32 %v1319, %v1365
    %v1384 = vadd.f32 %v1320, %v1367
    %v1385 = vadd.f32 %v1321, %v1369
    %v1386 = vld [vmem:[%s4] sm:$0xff]
    %v1387 = vld [vmem:[%s4 + $0x8] sm:$0xff]
    %v1388 = vld [vmem:[%s4 + $0x10] sm:$0xff]
    %v1389 = vld [vmem:[%s4 + $0x18] sm:$0xff]
    %v1390 = vld [vmem:[%s4 + $0x20] sm:$0xff]
    %v1391 = vld [vmem:[%s4 + $0x28] sm:$0xff]
    %v1392 = vld [vmem:[%s4 + $0x30] sm:$0xff]
    %v1393 = vld [vmem:[%s4 + $0x38] sm:$0xff]
    %v1394 = vld [vmem:[%s4 + $0x40] sm:$0xff]
    %v1395 = vld [vmem:[%s4 + $0x48] sm:$0xff]
    %v1396 = vld [vmem:[%s4 + $0x50] sm:$0xff]
    %v1397 = vld [vmem:[%s4 + $0x58] sm:$0xff]
    %v1398 = vld [vmem:[%s4 + $0x60] sm:$0xff]
    %v1399 = vld [vmem:[%s4 + $0x68] sm:$0xff]
    %v1400 = vld [vmem:[%s4 + $0x70] sm:$0xff]
    %v1401 = vld [vmem:[%s4 + $0x78] sm:$0xff]
    %v1402 = vld [vmem:[#allocation4] sm:$0xff]
    %v1403 = vld [vmem:[#allocation4 + $0x8] sm:$0xff]
    %v1404 = vld [vmem:[#allocation4 + $0x10] sm:$0xff]
    %v1405 = vld [vmem:[#allocation4 + $0x18] sm:$0xff]
    %v1406 = vld [vmem:[#allocation4 + $0x20] sm:$0xff]
    %v1407 = vld [vmem:[#allocation4 + $0x28] sm:$0xff]
    %v1408 = vld [vmem:[#allocation4 + $0x30] sm:$0xff]
    %v1409 = vld [vmem:[#allocation4 + $0x38] sm:$0xff]
    %v1410 = vld [vmem:[#allocation4 + $0x40] sm:$0xff]
    %v1411 = vld [vmem:[#allocation4 + $0x48] sm:$0xff]
    %v1412 = vld [vmem:[#allocation4 + $0x50] sm:$0xff]
    %v1413 = vld [vmem:[#allocation4 + $0x58] sm:$0xff]
    %v1414 = vld [vmem:[#allocation4 + $0x60] sm:$0xff]
    %v1415 = vld [vmem:[#allocation4 + $0x68] sm:$0xff]
    %v1416 = vld [vmem:[#allocation4 + $0x70] sm:$0xff]
    %v1417 = vld [vmem:[#allocation4 + $0x78] sm:$0xff]
    %v1418 = vmul.f32 %v1386, %v1402
    %v1419 = vmul.f32 %v1387, %v1403
    %v1420 = vmul.f32 %v1388, %v1404
    %v1421 = vmul.f32 %v1389, %v1405
    %v1422 = vmul.f32 %v1390, %v1406
    %v1423 = vmul.f32 %v1391, %v1407
    %v1424 = vmul.f32 %v1392, %v1408
    %v1425 = vmul.f32 %v1393, %v1409
    %v1426 = vmul.f32 %v1394, %v1410
    %v1427 = vmul.f32 %v1395, %v1411
    %v1428 = vmul.f32 %v1396, %v1412
    %v1429 = vmul.f32 %v1397, %v1413
    %v1430 = vmul.f32 %v1398, %v1414
    %v1431 = vmul.f32 %v1399, %v1415
    %v1432 = vmul.f32 %v1400, %v1416
    %v1433 = vmul.f32 %v1401, %v1417
    %v1434 = vld [vmem:[%s5] sm:$0xff]
    %v1435 = vld [vmem:[%s5 + $0x8] sm:$0xff]
    %v1436 = vld [vmem:[%s5 + $0x10] sm:$0xff]
    %v1437 = vld [vmem:[%s5 + $0x18] sm:$0xff]
    %v1438 = vld [vmem:[%s5 + $0x20] sm:$0xff]
    %v1439 = vld [vmem:[%s5 + $0x28] sm:$0xff]
    %v1440 = vld [vmem:[%s5 + $0x30] sm:$0xff]
    %v1441 = vld [vmem:[%s5 + $0x38] sm:$0xff]
    %v1442 = vld [vmem:[%s5 + $0x40] sm:$0xff]
    %v1443 = vld [vmem:[%s5 + $0x48] sm:$0xff]
    %v1444 = vld [vmem:[%s5 + $0x50] sm:$0xff]
    %v1445 = vld [vmem:[%s5 + $0x58] sm:$0xff]
    %v1446 = vld [vmem:[%s5 + $0x60] sm:$0xff]
    %v1447 = vld [vmem:[%s5 + $0x68] sm:$0xff]
    %v1448 = vld [vmem:[%s5 + $0x70] sm:$0xff]
    %v1449 = vld [vmem:[%s5 + $0x78] sm:$0xff]
    %v1450 = vmul.f32 %v1434, %v1370
    %v1451 = vmul.f32 %v1435, %v1371
    %v1452 = vmul.f32 %v1436, %v1372
    %v1453 = vmul.f32 %v1437, %v1373
    %v1454 = vmul.f32 %v1438, %v1374
    %v1455 = vmul.f32 %v1439, %v1375
    %v1456 = vmul.f32 %v1440, %v1376
    %v1457 = vmul.f32 %v1441, %v1377
    %v1458 = vmul.f32 %v1442, %v1378
    %v1459 = vmul.f32 %v1443, %v1379
    %v1460 = vmul.f32 %v1444, %v1380
    %v1461 = vmul.f32 %v1445, %v1381
    %v1462 = vmul.f32 %v1446, %v1382
    %v1463 = vmul.f32 %v1447, %v1383
    %v1464 = vmul.f32 %v1448, %v1384
    %v1465 = vmul.f32 %v1449, %v1385
    %v1466 = vsub.f32 %v1418, %v1450
    %v1467 = vsub.f32 %v1419, %v1451
    %v1468 = vsub.f32 %v1420, %v1452
    %v1469 = vsub.f32 %v1421, %v1453
    %v1470 = vsub.f32 %v1422, %v1454
    %v1471 = vsub.f32 %v1423, %v1455
    %v1472 = vsub.f32 %v1424, %v1456
    %v1473 = vsub.f32 %v1425, %v1457
    %v1474 = vsub.f32 %v1426, %v1458
    %v1475 = vsub.f32 %v1427, %v1459
    %v1476 = vsub.f32 %v1428, %v1460
    %v1477 = vsub.f32 %v1429, %v1461
    %v1478 = vsub.f32 %v1430, %v1462
    %v1479 = vsub.f32 %v1431, %v1463
    %v1480 = vsub.f32 %v1432, %v1464
    %v1481 = vsub.f32 %v1433, %v1465
    %vm1482 = vcmask 7168
    %1483 = vst.msk [vmem:[%s6] sm:$0xff] %vm1482, %v1466
    %1484 = vst.msk [vmem:[%s6 + $0x8] sm:$0xff] %vm1482, %v1467
    %1485 = vst.msk [vmem:[%s6 + $0x10] sm:$0xff] %vm1482, %v1468
    %1486 = vst.msk [vmem:[%s6 + $0x18] sm:$0xff] %vm1482, %v1469
    %1487 = vst.msk [vmem:[%s6 + $0x20] sm:$0xff] %vm1482, %v1470
    %1488 = vst.msk [vmem:[%s6 + $0x28] sm:$0xff] %vm1482, %v1471
    %1489 = vst.msk [vmem:[%s6 + $0x30] sm:$0xff] %vm1482, %v1472
    %1490 = vst.msk [vmem:[%s6 + $0x38] sm:$0xff] %vm1482, %v1473
    %1491 = vst.msk [vmem:[%s6 + $0x40] sm:$0xff] %vm1482, %v1474
    %1492 = vst.msk [vmem:[%s6 + $0x48] sm:$0xff] %vm1482, %v1475
    %1493 = vst.msk [vmem:[%s6 + $0x50] sm:$0xff] %vm1482, %v1476
    %1494 = vst.msk [vmem:[%s6 + $0x58] sm:$0xff] %vm1482, %v1477
    %1495 = vst.msk [vmem:[%s6 + $0x60] sm:$0xff] %vm1482, %v1478
    %1496 = vst.msk [vmem:[%s6 + $0x68] sm:$0xff] %vm1482, %v1479
    %1497 = vst.msk [vmem:[%s6 + $0x70] sm:$0xff] %vm1482, %v1480
    %1498 = vst.msk [vmem:[%s6 + $0x78] sm:$0xff] %vm1482, %v1481
  $region41: #{tpu_custom_call.1} parent=0 // pred_fallthru
    _
  // Predicated region
  $region42: #{tpu_custom_call.1} parent=0 // pred_check
    _
  $region43: #{tpu_custom_call.1} parent=0 // pred_check_branch
    %1500 = sbr.rel (0) target = $region45
  $region44: #{tpu_custom_call.1} parent=0 // pred_region
    _
  $region45: #{tpu_custom_call.1} parent=0 // pred_fallthru
    _
  // Predicated region
  $region46: #{tpu_custom_call.1} parent=0 // pred_check
    _
  $region47: #{tpu_custom_call.1} parent=0 // pred_check_branch
    %1502 = sbr.rel (0) target = $region49
  $region48: #{tpu_custom_call.1} parent=0 // pred_region
    _
  $region49: #{tpu_custom_call.1} parent=0 // pred_fallthru
    _

</llo_original>
